<compile_context>
chip_gen: v5e
topology: v5e:2x2
jax: 0.10.0
libtpu: 0.0.40
codegen_flags: <defaults>
</compile_context>

<pallas_src>
import functools

import jax
import jax.numpy as jnp
from jax import lax
from jax.experimental import pallas as pl
from jax.experimental.pallas import tpu as pltpu

HIDDEN = 64
SUBLANE = 8
LANE = 128


def _qnet_kernel(x_ref, h0_ref, c0_ref,
                 w1_ref, b1_ref,
                 wih_ref, bcomb_ref, whh_ref,
                 w2_ref, b2_ref,
                 out_ref, hout_ref, cout_ref,
                 gx_sc, hall_sc,
                 *, T, Bp, H):
    # ---------- pre-pass (non-recurrent, all T timesteps at once) ----------
    # z = relu(x @ W1^T + b1)                              -> (T*Bp, H)
    z = jnp.dot(x_ref[...], w1_ref[...], preferred_element_type=jnp.float32)
    z = jnp.maximum(z + b1_ref[...], 0.0)
    # gates_x = z @ W_ih^T + (b_ih + b_hh)                 -> (T*Bp, 4H)
    gx_sc[...] = (jnp.dot(z, wih_ref[...], preferred_element_type=jnp.float32)
                  + bcomb_ref[...])

    whh = whh_ref[...]                       # loop-invariant (H, 4H), hoisted

    # ---------- serial recurrence: only h @ W_hh^T + nonlinearities ----------
    # (h, c) carried as loop values -> stay in vregs, no per-step VMEM
    # store/load of the recurrent state.
    def step(t, carry):
        h_t, c_t = carry
        row = pl.multiple_of(t * Bp, Bp)     # sublane-aligned row offset
        gates = (gx_sc[pl.ds(row, Bp), :]
                 + jnp.dot(h_t, whh,
                           preferred_element_type=jnp.float32))  # (Bp, 4H)

        i_g = jax.nn.sigmoid(gates[:, 0 * H:1 * H])
        f_g = jax.nn.sigmoid(gates[:, 1 * H:2 * H])
        g_g = jnp.tanh(gates[:, 2 * H:3 * H])
        o_g = jax.nn.sigmoid(gates[:, 3 * H:4 * H])

        c_new = f_g * c_t + i_g * g_g
        h_new = o_g * jnp.tanh(c_new)

        hall_sc[pl.ds(row, Bp), :] = h_new   # per-step hidden for post-pass
        return (h_new, c_new)

    h_f, c_f = lax.fori_loop(0, T, step, (h0_ref[...], c0_ref[...]),
                             unroll=True)
    hout_ref[...] = h_f
    cout_ref[...] = c_f

    # ---------- post-pass linear2 over all timesteps at once ----------
    # w2/b2 are lane-padded to 128 wide -> unmasked lane-dense output store.
    out_ref[...] = (jnp.dot(hall_sc[...], w2_ref[...],
                            preferred_element_type=jnp.float32)
                    + b2_ref[...])


@jax.jit
def qnet_forward(params, x, h, c):
    """Pallas QNet forward. x: (B,T,S), h/c: (1,B,H). Returns (out, new_h, new_c)."""
    B, T, S = x.shape
    H = HIDDEN
    A = params["w2"].shape[0]
    Bp = ((B + SUBLANE - 1) // SUBLANE) * SUBLANE     # pad batch to sublane mult
    Ap = ((A + LANE - 1) // LANE) * LANE              # pad actions to lane width

    # Pad batch, flatten time-major to (T*Bp, S).
    xp = jnp.pad(x, ((0, Bp - B), (0, 0), (0, 0)))
    x_flat = jnp.transpose(xp, (1, 0, 2)).reshape(T * Bp, S)
    h0 = jnp.pad(h[0], ((0, Bp - B), (0, 0)))
    c0 = jnp.pad(c[0], ((0, Bp - B), (0, 0)))

    # Pre-transpose weights once, fold the two LSTM biases, lane-pad linear2.
    w1t = params["w1"].T                                   # (S, H)
    wiht = params["w_ih"].T                                # (H, 4H)
    whht = params["w_hh"].T                                # (H, 4H)
    w2t = jnp.pad(params["w2"].T, ((0, 0), (0, Ap - A)))   # (H, Ap)
    b2p = jnp.pad(params["b2"], ((0, 0), (0, Ap - A)))     # (1, Ap)
    bcomb = params["b_ih"] + params["b_hh"]                # (1, 4H)

    full = lambda shape: pl.BlockSpec(shape, lambda i: (0,) * len(shape))
    kernel = functools.partial(_qnet_kernel, T=T, Bp=Bp, H=H)

    out_flat, hout, cout = pl.pallas_call(
        kernel,
        out_shape=(
            jax.ShapeDtypeStruct((T * Bp, Ap), jnp.float32),
            jax.ShapeDtypeStruct((Bp, H), jnp.float32),
            jax.ShapeDtypeStruct((Bp, H), jnp.float32),
        ),
        grid_spec=pltpu.PrefetchScalarGridSpec(
            num_scalar_prefetch=0,
            grid=(1,),                                   # single invocation
            in_specs=[
                full((T * Bp, S)),                       # x (time-major flat)
                full((Bp, H)), full((Bp, H)),            # h0, c0
                full((S, H)), full((1, H)),              # W1^T, b1
                full((H, 4 * H)), full((1, 4 * H)),      # W_ih^T, b_ih+b_hh
                full((H, 4 * H)),                        # W_hh^T
                full((H, Ap)), full((1, Ap)),            # W2^T, b2 (lane-padded)
            ],
            out_specs=[
                full((T * Bp, Ap)),                      # per-step q-values
                full((Bp, H)),                           # final h
                full((Bp, H)),                           # final c
            ],
            scratch_shapes=[
                pltpu.VMEM((T * Bp, 4 * H), jnp.float32),  # gates_x pre-pass
                pltpu.VMEM((T * Bp, H), jnp.float32),      # per-step hidden
            ],
        ),
        compiler_params=pltpu.CompilerParams(
            dimension_semantics=("arbitrary",)),
    )(x_flat, h0, c0, w1t, params["b1"], wiht, bcomb, whht, w2t, b2p)

    out = jnp.transpose(out_flat.reshape(T, Bp, Ap)[:, :B, :A], (1, 0, 2))
    return out, hout[:B][None], cout[:B][None]


def init_params(key, state_space, action_space):
    """Deterministic synthetic parameters (PyTorch-default-like uniform init)."""
    H = HIDDEN
    ks = jax.random.split(key, 8)

    def u(k, shape, fan_in):
        bound = 1.0 / jnp.sqrt(fan_in)
        return jax.random.uniform(k, shape, jnp.float32, -bound, bound)

    return {
        "w1":   u(ks[0], (H, state_space), state_space),
        "b1":   u(ks[1], (1, H), state_space),
        "w_ih": u(ks[2], (4 * H, H), H),
        "b_ih": u(ks[3], (1, 4 * H), H),
        "w_hh": u(ks[4], (4 * H, H), H),
        "b_hh": u(ks[5], (1, 4 * H), H),
        "w2":   u(ks[6], (action_space, H), H),
        "b2":   u(ks[7], (1, action_space), H),
    }


def _reference_forward(params, x, h, c):
    """Pure-JAX reference (lax.scan over time) for verification."""
    H = HIDDEN
    z = jax.nn.relu(jnp.einsum("bts,hs->bth", x, params["w1"]) + params["b1"][0])

    def step(carry, z_t):
        h_t, c_t = carry
        gates = (z_t @ params["w_ih"].T + params["b_ih"][0]
                 + h_t @ params["w_hh"].T + params["b_hh"][0])
        i = jax.nn.sigmoid(gates[:, 0 * H:1 * H])
        f = jax.nn.sigmoid(gates[:, 1 * H:2 * H])
        g = jnp.tanh(gates[:, 2 * H:3 * H])
        o = jax.nn.sigmoid(gates[:, 3 * H:4 * H])
        c_new = f * c_t + i * g
        h_new = o * jnp.tanh(c_new)
        return (h_new, c_new), h_new

    (h_f, c_f), hs = jax.lax.scan(step, (h[0], c[0]),
                                  jnp.transpose(z, (1, 0, 2)))
    hs = jnp.transpose(hs, (1, 0, 2))                # (B, T, H)
    out = jnp.einsum("bth,ah->bta", hs, params["w2"]) + params["b2"][0]
    return out, h_f[None], c_f[None]


if __name__ == "__main__":
    B, T, S, A = 2, 8, 4, 2

    key = jax.random.PRNGKey(0)
    k_p, k_x = jax.random.split(key)
    params = init_params(k_p, S, A)

    x = jax.random.normal(k_x, (B, T, S), jnp.float32)
    h = jnp.zeros((1, B, HIDDEN), jnp.float32)
    c = jnp.zeros((1, B, HIDDEN), jnp.float32)

    out, new_h, new_c = qnet_forward(params, x, h, c)
    jax.block_until_ready((out, new_h, new_c))

    ref_out, ref_h, ref_c = _reference_forward(params, x, h, c)
    assert out.shape == (B, T, A) and new_h.shape == (1, B, HIDDEN)
    assert jnp.allclose(out, ref_out, atol=1e-4)
    assert jnp.allclose(new_h, ref_h, atol=1e-4)
    assert jnp.allclose(new_c, ref_c, atol=1e-4)

    print("KERNEL_OK")
</pallas_src>

<mosaic_0001>
module attributes {stable_mosaic.version = 11 : i64} {
  func.func @_qnet_kernel(%arg0: i32, %arg1: memref<64x4xf32, #tpu.memory_space<vmem>>, %arg2: memref<8x64xf32, #tpu.memory_space<vmem>>, %arg3: memref<8x64xf32, #tpu.memory_space<vmem>>, %arg4: memref<4x64xf32, #tpu.memory_space<vmem>>, %arg5: memref<1x64xf32, #tpu.memory_space<vmem>>, %arg6: memref<64x256xf32, #tpu.memory_space<vmem>>, %arg7: memref<1x256xf32, #tpu.memory_space<vmem>>, %arg8: memref<64x256xf32, #tpu.memory_space<vmem>>, %arg9: memref<64x128xf32, #tpu.memory_space<vmem>>, %arg10: memref<1x128xf32, #tpu.memory_space<vmem>>, %arg11: memref<64x128xf32, #tpu.memory_space<vmem>>, %arg12: memref<8x64xf32, #tpu.memory_space<vmem>>, %arg13: memref<8x64xf32, #tpu.memory_space<vmem>>, %arg14: memref<64x256xf32, #tpu.memory_space<vmem>>, %arg15: memref<64x64xf32, #tpu.memory_space<vmem>>) attributes {dimension_semantics = [#tpu.dimension_semantics<arbitrary>], iteration_bounds = array<i64: 1>, scalar_prefetch = 0 : i64, scratch_operands = 2 : i64, tpu.core_type = #tpu.core_type<tc>, window_params = [{pipeline_mode = #tpu.pipeline_mode<synchronous>, transform_indices = @transform_0, window_bounds = array<i64: 64, 4>}, {pipeline_mode = #tpu.pipeline_mode<synchronous>, transform_indices = @transform_1, window_bounds = array<i64: 8, 64>}, {pipeline_mode = #tpu.pipeline_mode<synchronous>, transform_indices = @transform_2, window_bounds = array<i64: 8, 64>}, {pipeline_mode = #tpu.pipeline_mode<synchronous>, transform_indices = @transform_3, window_bounds = array<i64: 4, 64>}, {pipeline_mode = #tpu.pipeline_mode<synchronous>, transform_indices = @transform_4, window_bounds = array<i64: 1, 64>}, {pipeline_mode = #tpu.pipeline_mode<synchronous>, transform_indices = @transform_5, window_bounds = array<i64: 64, 256>}, {pipeline_mode = #tpu.pipeline_mode<synchronous>, transform_indices = @transform_6, window_bounds = array<i64: 1, 256>}, {pipeline_mode = #tpu.pipeline_mode<synchronous>, transform_indices = @transform_7, window_bounds = array<i64: 64, 256>}, {pipeline_mode = #tpu.pipeline_mode<synchronous>, transform_indices = @transform_8, window_bounds = array<i64: 64, 128>}, {pipeline_mode = #tpu.pipeline_mode<synchronous>, transform_indices = @transform_9, window_bounds = array<i64: 1, 128>}, {pipeline_mode = #tpu.pipeline_mode<synchronous>, transform_indices = @transform_10, window_bounds = array<i64: 64, 128>}, {pipeline_mode = #tpu.pipeline_mode<synchronous>, transform_indices = @transform_11, window_bounds = array<i64: 8, 64>}, {pipeline_mode = #tpu.pipeline_mode<synchronous>, transform_indices = @transform_12, window_bounds = array<i64: 8, 64>}]} {
    %c0 = arith.constant 0 : index
    %c0_0 = arith.constant 0 : index
    %0 = vector.load %arg1[%c0, %c0_0] : memref<64x4xf32, #tpu.memory_space<vmem>>, vector<64x4xf32>
    %c0_1 = arith.constant 0 : index
    %c0_2 = arith.constant 0 : index
    %1 = vector.load %arg4[%c0_1, %c0_2] : memref<4x64xf32, #tpu.memory_space<vmem>>, vector<4x64xf32>
    %cst = arith.constant dense<0.000000e+00> : vector<64x64xf32>
    %2 = tpu.matmul %0, %1, %cst {dimension_numbers = #tpu.dot_dimension_numbers<[1], [0], [0], [1], [0, 0, 1, 1], [], []>} : vector<64x4xf32>, vector<4x64xf32>, vector<64x64xf32> -> vector<64x64xf32>
    %c0_3 = arith.constant 0 : index
    %c0_4 = arith.constant 0 : index
    %3 = vector.load %arg5[%c0_3, %c0_4] : memref<1x64xf32, #tpu.memory_space<vmem>>, vector<1x64xf32>
    %4 = vector.broadcast %3 : vector<1x64xf32> to vector<64x64xf32>
    %5 = arith.addf %2, %4 : vector<64x64xf32>
    %cst_5 = arith.constant 0.000000e+00 : f32
    %6 = vector.broadcast %cst_5 : f32 to vector<64x64xf32>
    %7 = arith.maximumf %5, %6 : vector<64x64xf32>
    %c0_6 = arith.constant 0 : index
    %c0_7 = arith.constant 0 : index
    %8 = vector.load %arg6[%c0_6, %c0_7] : memref<64x256xf32, #tpu.memory_space<vmem>>, vector<64x256xf32>
    %cst_8 = arith.constant dense<0.000000e+00> : vector<64x256xf32>
    %9 = tpu.matmul %7, %8, %cst_8 {dimension_numbers = #tpu.dot_dimension_numbers<[1], [0], [0], [1], [0, 0, 1, 1], [], []>} : vector<64x64xf32>, vector<64x256xf32>, vector<64x256xf32> -> vector<64x256xf32>
    %c0_9 = arith.constant 0 : index
    %c0_10 = arith.constant 0 : index
    %10 = vector.load %arg7[%c0_9, %c0_10] : memref<1x256xf32, #tpu.memory_space<vmem>>, vector<1x256xf32>
    %11 = vector.broadcast %10 : vector<1x256xf32> to vector<64x256xf32>
    %12 = arith.addf %9, %11 : vector<64x256xf32>
    %c0_11 = arith.constant 0 : index
    %c0_12 = arith.constant 0 : index
    %13 = vector.load %arg14[%c0_11, %c0_12] : memref<64x256xf32, #tpu.memory_space<vmem>>, vector<64x256xf32>
    tpu.vector_store %arg14[%c0_11, %c0_12], %12 {strides = array<i32>} : memref<64x256xf32, #tpu.memory_space<vmem>>, vector<64x256xf32>,
    %c0_13 = arith.constant 0 : index
    %c0_14 = arith.constant 0 : index
    %14 = vector.load %arg8[%c0_13, %c0_14] : memref<64x256xf32, #tpu.memory_space<vmem>>, vector<64x256xf32>
    %c0_15 = arith.constant 0 : index
    %c0_16 = arith.constant 0 : index
    %15 = vector.load %arg2[%c0_15, %c0_16] : memref<8x64xf32, #tpu.memory_space<vmem>>, vector<8x64xf32>
    %c0_17 = arith.constant 0 : index
    %c0_18 = arith.constant 0 : index
    %16 = vector.load %arg3[%c0_17, %c0_18] : memref<8x64xf32, #tpu.memory_space<vmem>>, vector<8x64xf32>
    %c0_i32 = arith.constant 0 : i32
    %c8_i32 = arith.constant 8 : i32
    %17 = arith.muli %c0_i32, %c8_i32 : i32
    %18 = tpu.assume_multiple %17, 8 : i32
    %19 = arith.index_cast %18 : i32 to index
    %c0_19 = arith.constant 0 : index
    %20 = vector.load %arg14[%19, %c0_19] : memref<64x256xf32, #tpu.memory_space<vmem>>, vector<8x256xf32>
    %cst_20 = arith.constant dense<0.000000e+00> : vector<8x256xf32>
    %21 = tpu.matmul %15, %14, %cst_20 {dimension_numbers = #tpu.dot_dimension_numbers<[1], [0], [0], [1], [0, 0, 1, 1], [], []>} : vector<8x64xf32>, vector<64x256xf32>, vector<8x256xf32> -> vector<8x256xf32>
    %22 = arith.addf %20, %21 : vector<8x256xf32>
    %23 = vector.extract_strided_slice %22 {offsets = [0, 0], sizes = [8, 64], strides = [1, 1]} : vector<8x256xf32> to vector<8x64xf32>
    %24 = arith.negf %23 : vector<8x64xf32>
    %25 = math.exp %24 : vector<8x64xf32>
    %cst_21 = arith.constant 1.000000e+00 : f32
    %26 = vector.broadcast %cst_21 : f32 to vector<8x64xf32>
    %27 = arith.addf %26, %25 : vector<8x64xf32>
    %28 = arith.divf %26, %27 : vector<8x64xf32>
    %29 = vector.extract_strided_slice %22 {offsets = [0, 64], sizes = [8, 64], strides = [1, 1]} : vector<8x256xf32> to vector<8x64xf32>
    %30 = arith.negf %29 : vector<8x64xf32>
    %31 = math.exp %30 : vector<8x64xf32>
    %cst_22 = arith.constant 1.000000e+00 : f32
    %32 = vector.broadcast %cst_22 : f32 to vector<8x64xf32>
    %33 = arith.addf %32, %31 : vector<8x64xf32>
    %34 = arith.divf %32, %33 : vector<8x64xf32>
    %35 = vector.extract_strided_slice %22 {offsets = [0, 128], sizes = [8, 64], strides = [1, 1]} : vector<8x256xf32> to vector<8x64xf32>
    %36 = math.tanh %35 : vector<8x64xf32>
    %37 = vector.extract_strided_slice %22 {offsets = [0, 192], sizes = [8, 64], strides = [1, 1]} : vector<8x256xf32> to vector<8x64xf32>
    %38 = arith.negf %37 : vector<8x64xf32>
    %39 = math.exp %38 : vector<8x64xf32>
    %cst_23 = arith.constant 1.000000e+00 : f32
    %40 = vector.broadcast %cst_23 : f32 to vector<8x64xf32>
    %41 = arith.addf %40, %39 : vector<8x64xf32>
    %42 = arith.divf %40, %41 : vector<8x64xf32>
    %43 = arith.mulf %34, %16 : vector<8x64xf32>
    %44 = arith.mulf %28, %36 : vector<8x64xf32>
    %45 = arith.addf %43, %44 : vector<8x64xf32>
    %46 = math.tanh %45 : vector<8x64xf32>
    %47 = arith.mulf %42, %46 : vector<8x64xf32>
    %48 = arith.index_cast %18 : i32 to index
    %c0_24 = arith.constant 0 : index
    %49 = vector.load %arg15[%48, %c0_24] : memref<64x64xf32, #tpu.memory_space<vmem>>, vector<8x64xf32>
    tpu.vector_store %arg15[%48, %c0_24], %47 {strides = array<i32>} : memref<64x64xf32, #tpu.memory_space<vmem>>, vector<8x64xf32>,
    %c1_i32 = arith.constant 1 : i32
    %c8_i32_25 = arith.constant 8 : i32
    %50 = arith.muli %c1_i32, %c8_i32_25 : i32
    %51 = tpu.assume_multiple %50, 8 : i32
    %52 = arith.index_cast %51 : i32 to index
    %c0_26 = arith.constant 0 : index
    %53 = vector.load %arg14[%52, %c0_26] : memref<64x256xf32, #tpu.memory_space<vmem>>, vector<8x256xf32>
    %cst_27 = arith.constant dense<0.000000e+00> : vector<8x256xf32>
    %54 = tpu.matmul %47, %14, %cst_27 {dimension_numbers = #tpu.dot_dimension_numbers<[1], [0], [0], [1], [0, 0, 1, 1], [], []>} : vector<8x64xf32>, vector<64x256xf32>, vector<8x256xf32> -> vector<8x256xf32>
    %55 = arith.addf %53, %54 : vector<8x256xf32>
    %56 = vector.extract_strided_slice %55 {offsets = [0, 0], sizes = [8, 64], strides = [1, 1]} : vector<8x256xf32> to vector<8x64xf32>
    %57 = arith.negf %56 : vector<8x64xf32>
    %58 = math.exp %57 : vector<8x64xf32>
    %cst_28 = arith.constant 1.000000e+00 : f32
    %59 = vector.broadcast %cst_28 : f32 to vector<8x64xf32>
    %60 = arith.addf %59, %58 : vector<8x64xf32>
    %61 = arith.divf %59, %60 : vector<8x64xf32>
    %62 = vector.extract_strided_slice %55 {offsets = [0, 64], sizes = [8, 64], strides = [1, 1]} : vector<8x256xf32> to vector<8x64xf32>
    %63 = arith.negf %62 : vector<8x64xf32>
    %64 = math.exp %63 : vector<8x64xf32>
    %cst_29 = arith.constant 1.000000e+00 : f32
    %65 = vector.broadcast %cst_29 : f32 to vector<8x64xf32>
    %66 = arith.addf %65, %64 : vector<8x64xf32>
    %67 = arith.divf %65, %66 : vector<8x64xf32>
    %68 = vector.extract_strided_slice %55 {offsets = [0, 128], sizes = [8, 64], strides = [1, 1]} : vector<8x256xf32> to vector<8x64xf32>
    %69 = math.tanh %68 : vector<8x64xf32>
    %70 = vector.extract_strided_slice %55 {offsets = [0, 192], sizes = [8, 64], strides = [1, 1]} : vector<8x256xf32> to vector<8x64xf32>
    %71 = arith.negf %70 : vector<8x64xf32>
    %72 = math.exp %71 : vector<8x64xf32>
    %cst_30 = arith.constant 1.000000e+00 : f32
    %73 = vector.broadcast %cst_30 : f32 to vector<8x64xf32>
    %74 = arith.addf %73, %72 : vector<8x64xf32>
    %75 = arith.divf %73, %74 : vector<8x64xf32>
    %76 = arith.mulf %67, %45 : vector<8x64xf32>
    %77 = arith.mulf %61, %69 : vector<8x64xf32>
    %78 = arith.addf %76, %77 : vector<8x64xf32>
    %79 = math.tanh %78 : vector<8x64xf32>
    %80 = arith.mulf %75, %79 : vector<8x64xf32>
    %81 = arith.index_cast %51 : i32 to index
    %c0_31 = arith.constant 0 : index
    %82 = vector.load %arg15[%81, %c0_31] : memref<64x64xf32, #tpu.memory_space<vmem>>, vector<8x64xf32>
    tpu.vector_store %arg15[%81, %c0_31], %80 {strides = array<i32>} : memref<64x64xf32, #tpu.memory_space<vmem>>, vector<8x64xf32>,
    %c2_i32 = arith.constant 2 : i32
    %c8_i32_32 = arith.constant 8 : i32
    %83 = arith.muli %c2_i32, %c8_i32_32 : i32
    %84 = tpu.assume_multiple %83, 8 : i32
    %85 = arith.index_cast %84 : i32 to index
    %c0_33 = arith.constant 0 : index
    %86 = vector.load %arg14[%85, %c0_33] : memref<64x256xf32, #tpu.memory_space<vmem>>, vector<8x256xf32>
    %cst_34 = arith.constant dense<0.000000e+00> : vector<8x256xf32>
    %87 = tpu.matmul %80, %14, %cst_34 {dimension_numbers = #tpu.dot_dimension_numbers<[1], [0], [0], [1], [0, 0, 1, 1], [], []>} : vector<8x64xf32>, vector<64x256xf32>, vector<8x256xf32> -> vector<8x256xf32>
    %88 = arith.addf %86, %87 : vector<8x256xf32>
    %89 = vector.extract_strided_slice %88 {offsets = [0, 0], sizes = [8, 64], strides = [1, 1]} : vector<8x256xf32> to vector<8x64xf32>
    %90 = arith.negf %89 : vector<8x64xf32>
    %91 = math.exp %90 : vector<8x64xf32>
    %cst_35 = arith.constant 1.000000e+00 : f32
    %92 = vector.broadcast %cst_35 : f32 to vector<8x64xf32>
    %93 = arith.addf %92, %91 : vector<8x64xf32>
    %94 = arith.divf %92, %93 : vector<8x64xf32>
    %95 = vector.extract_strided_slice %88 {offsets = [0, 64], sizes = [8, 64], strides = [1, 1]} : vector<8x256xf32> to vector<8x64xf32>
    %96 = arith.negf %95 : vector<8x64xf32>
    %97 = math.exp %96 : vector<8x64xf32>
    %cst_36 = arith.constant 1.000000e+00 : f32
    %98 = vector.broadcast %cst_36 : f32 to vector<8x64xf32>
    %99 = arith.addf %98, %97 : vector<8x64xf32>
    %100 = arith.divf %98, %99 : vector<8x64xf32>
    %101 = vector.extract_strided_slice %88 {offsets = [0, 128], sizes = [8, 64], strides = [1, 1]} : vector<8x256xf32> to vector<8x64xf32>
    %102 = math.tanh %101 : vector<8x64xf32>
    %103 = vector.extract_strided_slice %88 {offsets = [0, 192], sizes = [8, 64], strides = [1, 1]} : vector<8x256xf32> to vector<8x64xf32>
    %104 = arith.negf %103 : vector<8x64xf32>
    %105 = math.exp %104 : vector<8x64xf32>
    %cst_37 = arith.constant 1.000000e+00 : f32
    %106 = vector.broadcast %cst_37 : f32 to vector<8x64xf32>
    %107 = arith.addf %106, %105 : vector<8x64xf32>
    %108 = arith.divf %106, %107 : vector<8x64xf32>
    %109 = arith.mulf %100, %78 : vector<8x64xf32>
    %110 = arith.mulf %94, %102 : vector<8x64xf32>
    %111 = arith.addf %109, %110 : vector<8x64xf32>
    %112 = math.tanh %111 : vector<8x64xf32>
    %113 = arith.mulf %108, %112 : vector<8x64xf32>
    %114 = arith.index_cast %84 : i32 to index
    %c0_38 = arith.constant 0 : index
    %115 = vector.load %arg15[%114, %c0_38] : memref<64x64xf32, #tpu.memory_space<vmem>>, vector<8x64xf32>
    tpu.vector_store %arg15[%114, %c0_38], %113 {strides = array<i32>} : memref<64x64xf32, #tpu.memory_space<vmem>>, vector<8x64xf32>,
    %c3_i32 = arith.constant 3 : i32
    %c8_i32_39 = arith.constant 8 : i32
    %116 = arith.muli %c3_i32, %c8_i32_39 : i32
    %117 = tpu.assume_multiple %116, 8 : i32
    %118 = arith.index_cast %117 : i32 to index
    %c0_40 = arith.constant 0 : index
    %119 = vector.load %arg14[%118, %c0_40] : memref<64x256xf32, #tpu.memory_space<vmem>>, vector<8x256xf32>
    %cst_41 = arith.constant dense<0.000000e+00> : vector<8x256xf32>
    %120 = tpu.matmul %113, %14, %cst_41 {dimension_numbers = #tpu.dot_dimension_numbers<[1], [0], [0], [1], [0, 0, 1, 1], [], []>} : vector<8x64xf32>, vector<64x256xf32>, vector<8x256xf32> -> vector<8x256xf32>
    %121 = arith.addf %119, %120 : vector<8x256xf32>
    %122 = vector.extract_strided_slice %121 {offsets = [0, 0], sizes = [8, 64], strides = [1, 1]} : vector<8x256xf32> to vector<8x64xf32>
    %123 = arith.negf %122 : vector<8x64xf32>
    %124 = math.exp %123 : vector<8x64xf32>
    %cst_42 = arith.constant 1.000000e+00 : f32
    %125 = vector.broadcast %cst_42 : f32 to vector<8x64xf32>
    %126 = arith.addf %125, %124 : vector<8x64xf32>
    %127 = arith.divf %125, %126 : vector<8x64xf32>
    %128 = vector.extract_strided_slice %121 {offsets = [0, 64], sizes = [8, 64], strides = [1, 1]} : vector<8x256xf32> to vector<8x64xf32>
    %129 = arith.negf %128 : vector<8x64xf32>
    %130 = math.exp %129 : vector<8x64xf32>
    %cst_43 = arith.constant 1.000000e+00 : f32
    %131 = vector.broadcast %cst_43 : f32 to vector<8x64xf32>
    %132 = arith.addf %131, %130 : vector<8x64xf32>
    %133 = arith.divf %131, %132 : vector<8x64xf32>
    %134 = vector.extract_strided_slice %121 {offsets = [0, 128], sizes = [8, 64], strides = [1, 1]} : vector<8x256xf32> to vector<8x64xf32>
    %135 = math.tanh %134 : vector<8x64xf32>
    %136 = vector.extract_strided_slice %121 {offsets = [0, 192], sizes = [8, 64], strides = [1, 1]} : vector<8x256xf32> to vector<8x64xf32>
    %137 = arith.negf %136 : vector<8x64xf32>
    %138 = math.exp %137 : vector<8x64xf32>
    %cst_44 = arith.constant 1.000000e+00 : f32
    %139 = vector.broadcast %cst_44 : f32 to vector<8x64xf32>
    %140 = arith.addf %139, %138 : vector<8x64xf32>
    %141 = arith.divf %139, %140 : vector<8x64xf32>
    %142 = arith.mulf %133, %111 : vector<8x64xf32>
    %143 = arith.mulf %127, %135 : vector<8x64xf32>
    %144 = arith.addf %142, %143 : vector<8x64xf32>
    %145 = math.tanh %144 : vector<8x64xf32>
    %146 = arith.mulf %141, %145 : vector<8x64xf32>
    %147 = arith.index_cast %117 : i32 to index
    %c0_45 = arith.constant 0 : index
    %148 = vector.load %arg15[%147, %c0_45] : memref<64x64xf32, #tpu.memory_space<vmem>>, vector<8x64xf32>
    tpu.vector_store %arg15[%147, %c0_45], %146 {strides = array<i32>} : memref<64x64xf32, #tpu.memory_space<vmem>>, vector<8x64xf32>,
    %c4_i32 = arith.constant 4 : i32
    %c8_i32_46 = arith.constant 8 : i32
    %149 = arith.muli %c4_i32, %c8_i32_46 : i32
    %150 = tpu.assume_multiple %149, 8 : i32
    %151 = arith.index_cast %150 : i32 to index
    %c0_47 = arith.constant 0 : index
    %152 = vector.load %arg14[%151, %c0_47] : memref<64x256xf32, #tpu.memory_space<vmem>>, vector<8x256xf32>
    %cst_48 = arith.constant dense<0.000000e+00> : vector<8x256xf32>
    %153 = tpu.matmul %146, %14, %cst_48 {dimension_numbers = #tpu.dot_dimension_numbers<[1], [0], [0], [1], [0, 0, 1, 1], [], []>} : vector<8x64xf32>, vector<64x256xf32>, vector<8x256xf32> -> vector<8x256xf32>
    %154 = arith.addf %152, %153 : vector<8x256xf32>
    %155 = vector.extract_strided_slice %154 {offsets = [0, 0], sizes = [8, 64], strides = [1, 1]} : vector<8x256xf32> to vector<8x64xf32>
    %156 = arith.negf %155 : vector<8x64xf32>
    %157 = math.exp %156 : vector<8x64xf32>
    %cst_49 = arith.constant 1.000000e+00 : f32
    %158 = vector.broadcast %cst_49 : f32 to vector<8x64xf32>
    %159 = arith.addf %158, %157 : vector<8x64xf32>
    %160 = arith.divf %158, %159 : vector<8x64xf32>
    %161 = vector.extract_strided_slice %154 {offsets = [0, 64], sizes = [8, 64], strides = [1, 1]} : vector<8x256xf32> to vector<8x64xf32>
    %162 = arith.negf %161 : vector<8x64xf32>
    %163 = math.exp %162 : vector<8x64xf32>
    %cst_50 = arith.constant 1.000000e+00 : f32
    %164 = vector.broadcast %cst_50 : f32 to vector<8x64xf32>
    %165 = arith.addf %164, %163 : vector<8x64xf32>
    %166 = arith.divf %164, %165 : vector<8x64xf32>
    %167 = vector.extract_strided_slice %154 {offsets = [0, 128], sizes = [8, 64], strides = [1, 1]} : vector<8x256xf32> to vector<8x64xf32>
    %168 = math.tanh %167 : vector<8x64xf32>
    %169 = vector.extract_strided_slice %154 {offsets = [0, 192], sizes = [8, 64], strides = [1, 1]} : vector<8x256xf32> to vector<8x64xf32>
    %170 = arith.negf %169 : vector<8x64xf32>
    %171 = math.exp %170 : vector<8x64xf32>
    %cst_51 = arith.constant 1.000000e+00 : f32
    %172 = vector.broadcast %cst_51 : f32 to vector<8x64xf32>
    %173 = arith.addf %172, %171 : vector<8x64xf32>
    %174 = arith.divf %172, %173 : vector<8x64xf32>
    %175 = arith.mulf %166, %144 : vector<8x64xf32>
    %176 = arith.mulf %160, %168 : vector<8x64xf32>
    %177 = arith.addf %175, %176 : vector<8x64xf32>
    %178 = math.tanh %177 : vector<8x64xf32>
    %179 = arith.mulf %174, %178 : vector<8x64xf32>
    %180 = arith.index_cast %150 : i32 to index
    %c0_52 = arith.constant 0 : index
    %181 = vector.load %arg15[%180, %c0_52] : memref<64x64xf32, #tpu.memory_space<vmem>>, vector<8x64xf32>
    tpu.vector_store %arg15[%180, %c0_52], %179 {strides = array<i32>} : memref<64x64xf32, #tpu.memory_space<vmem>>, vector<8x64xf32>,
    %c5_i32 = arith.constant 5 : i32
    %c8_i32_53 = arith.constant 8 : i32
    %182 = arith.muli %c5_i32, %c8_i32_53 : i32
    %183 = tpu.assume_multiple %182, 8 : i32
    %184 = arith.index_cast %183 : i32 to index
    %c0_54 = arith.constant 0 : index
    %185 = vector.load %arg14[%184, %c0_54] : memref<64x256xf32, #tpu.memory_space<vmem>>, vector<8x256xf32>
    %cst_55 = arith.constant dense<0.000000e+00> : vector<8x256xf32>
    %186 = tpu.matmul %179, %14, %cst_55 {dimension_numbers = #tpu.dot_dimension_numbers<[1], [0], [0], [1], [0, 0, 1, 1], [], []>} : vector<8x64xf32>, vector<64x256xf32>, vector<8x256xf32> -> vector<8x256xf32>
    %187 = arith.addf %185, %186 : vector<8x256xf32>
    %188 = vector.extract_strided_slice %187 {offsets = [0, 0], sizes = [8, 64], strides = [1, 1]} : vector<8x256xf32> to vector<8x64xf32>
    %189 = arith.negf %188 : vector<8x64xf32>
    %190 = math.exp %189 : vector<8x64xf32>
    %cst_56 = arith.constant 1.000000e+00 : f32
    %191 = vector.broadcast %cst_56 : f32 to vector<8x64xf32>
    %192 = arith.addf %191, %190 : vector<8x64xf32>
    %193 = arith.divf %191, %192 : vector<8x64xf32>
    %194 = vector.extract_strided_slice %187 {offsets = [0, 64], sizes = [8, 64], strides = [1, 1]} : vector<8x256xf32> to vector<8x64xf32>
    %195 = arith.negf %194 : vector<8x64xf32>
    %196 = math.exp %195 : vector<8x64xf32>
    %cst_57 = arith.constant 1.000000e+00 : f32
    %197 = vector.broadcast %cst_57 : f32 to vector<8x64xf32>
    %198 = arith.addf %197, %196 : vector<8x64xf32>
    %199 = arith.divf %197, %198 : vector<8x64xf32>
    %200 = vector.extract_strided_slice %187 {offsets = [0, 128], sizes = [8, 64], strides = [1, 1]} : vector<8x256xf32> to vector<8x64xf32>
    %201 = math.tanh %200 : vector<8x64xf32>
    %202 = vector.extract_strided_slice %187 {offsets = [0, 192], sizes = [8, 64], strides = [1, 1]} : vector<8x256xf32> to vector<8x64xf32>
    %203 = arith.negf %202 : vector<8x64xf32>
    %204 = math.exp %203 : vector<8x64xf32>
    %cst_58 = arith.constant 1.000000e+00 : f32
    %205 = vector.broadcast %cst_58 : f32 to vector<8x64xf32>
    %206 = arith.addf %205, %204 : vector<8x64xf32>
    %207 = arith.divf %205, %206 : vector<8x64xf32>
    %208 = arith.mulf %199, %177 : vector<8x64xf32>
    %209 = arith.mulf %193, %201 : vector<8x64xf32>
    %210 = arith.addf %208, %209 : vector<8x64xf32>
    %211 = math.tanh %210 : vector<8x64xf32>
    %212 = arith.mulf %207, %211 : vector<8x64xf32>
    %213 = arith.index_cast %183 : i32 to index
    %c0_59 = arith.constant 0 : index
    %214 = vector.load %arg15[%213, %c0_59] : memref<64x64xf32, #tpu.memory_space<vmem>>, vector<8x64xf32>
    tpu.vector_store %arg15[%213, %c0_59], %212 {strides = array<i32>} : memref<64x64xf32, #tpu.memory_space<vmem>>, vector<8x64xf32>,
    %c6_i32 = arith.constant 6 : i32
    %c8_i32_60 = arith.constant 8 : i32
    %215 = arith.muli %c6_i32, %c8_i32_60 : i32
    %216 = tpu.assume_multiple %215, 8 : i32
    %217 = arith.index_cast %216 : i32 to index
    %c0_61 = arith.constant 0 : index
    %218 = vector.load %arg14[%217, %c0_61] : memref<64x256xf32, #tpu.memory_space<vmem>>, vector<8x256xf32>
    %cst_62 = arith.constant dense<0.000000e+00> : vector<8x256xf32>
    %219 = tpu.matmul %212, %14, %cst_62 {dimension_numbers = #tpu.dot_dimension_numbers<[1], [0], [0], [1], [0, 0, 1, 1], [], []>} : vector<8x64xf32>, vector<64x256xf32>, vector<8x256xf32> -> vector<8x256xf32>
    %220 = arith.addf %218, %219 : vector<8x256xf32>
    %221 = vector.extract_strided_slice %220 {offsets = [0, 0], sizes = [8, 64], strides = [1, 1]} : vector<8x256xf32> to vector<8x64xf32>
    %222 = arith.negf %221 : vector<8x64xf32>
    %223 = math.exp %222 : vector<8x64xf32>
    %cst_63 = arith.constant 1.000000e+00 : f32
    %224 = vector.broadcast %cst_63 : f32 to vector<8x64xf32>
    %225 = arith.addf %224, %223 : vector<8x64xf32>
    %226 = arith.divf %224, %225 : vector<8x64xf32>
    %227 = vector.extract_strided_slice %220 {offsets = [0, 64], sizes = [8, 64], strides = [1, 1]} : vector<8x256xf32> to vector<8x64xf32>
    %228 = arith.negf %227 : vector<8x64xf32>
    %229 = math.exp %228 : vector<8x64xf32>
    %cst_64 = arith.constant 1.000000e+00 : f32
    %230 = vector.broadcast %cst_64 : f32 to vector<8x64xf32>
    %231 = arith.addf %230, %229 : vector<8x64xf32>
    %232 = arith.divf %230, %231 : vector<8x64xf32>
    %233 = vector.extract_strided_slice %220 {offsets = [0, 128], sizes = [8, 64], strides = [1, 1]} : vector<8x256xf32> to vector<8x64xf32>
    %234 = math.tanh %233 : vector<8x64xf32>
    %235 = vector.extract_strided_slice %220 {offsets = [0, 192], sizes = [8, 64], strides = [1, 1]} : vector<8x256xf32> to vector<8x64xf32>
    %236 = arith.negf %235 : vector<8x64xf32>
    %237 = math.exp %236 : vector<8x64xf32>
    %cst_65 = arith.constant 1.000000e+00 : f32
    %238 = vector.broadcast %cst_65 : f32 to vector<8x64xf32>
    %239 = arith.addf %238, %237 : vector<8x64xf32>
    %240 = arith.divf %238, %239 : vector<8x64xf32>
    %241 = arith.mulf %232, %210 : vector<8x64xf32>
    %242 = arith.mulf %226, %234 : vector<8x64xf32>
    %243 = arith.addf %241, %242 : vector<8x64xf32>
    %244 = math.tanh %243 : vector<8x64xf32>
    %245 = arith.mulf %240, %244 : vector<8x64xf32>
    %246 = arith.index_cast %216 : i32 to index
    %c0_66 = arith.constant 0 : index
    %247 = vector.load %arg15[%246, %c0_66] : memref<64x64xf32, #tpu.memory_space<vmem>>, vector<8x64xf32>
    tpu.vector_store %arg15[%246, %c0_66], %245 {strides = array<i32>} : memref<64x64xf32, #tpu.memory_space<vmem>>, vector<8x64xf32>,
    %c7_i32 = arith.constant 7 : i32
    %c8_i32_67 = arith.constant 8 : i32
    %248 = arith.muli %c7_i32, %c8_i32_67 : i32
    %249 = tpu.assume_multiple %248, 8 : i32
    %250 = arith.index_cast %249 : i32 to index
    %c0_68 = arith.constant 0 : index
    %251 = vector.load %arg14[%250, %c0_68] : memref<64x256xf32, #tpu.memory_space<vmem>>, vector<8x256xf32>
    %cst_69 = arith.constant dense<0.000000e+00> : vector<8x256xf32>
    %252 = tpu.matmul %245, %14, %cst_69 {dimension_numbers = #tpu.dot_dimension_numbers<[1], [0], [0], [1], [0, 0, 1, 1], [], []>} : vector<8x64xf32>, vector<64x256xf32>, vector<8x256xf32> -> vector<8x256xf32>
    %253 = arith.addf %251, %252 : vector<8x256xf32>
    %254 = vector.extract_strided_slice %253 {offsets = [0, 0], sizes = [8, 64], strides = [1, 1]} : vector<8x256xf32> to vector<8x64xf32>
    %255 = arith.negf %254 : vector<8x64xf32>
    %256 = math.exp %255 : vector<8x64xf32>
    %cst_70 = arith.constant 1.000000e+00 : f32
    %257 = vector.broadcast %cst_70 : f32 to vector<8x64xf32>
    %258 = arith.addf %257, %256 : vector<8x64xf32>
    %259 = arith.divf %257, %258 : vector<8x64xf32>
    %260 = vector.extract_strided_slice %253 {offsets = [0, 64], sizes = [8, 64], strides = [1, 1]} : vector<8x256xf32> to vector<8x64xf32>
    %261 = arith.negf %260 : vector<8x64xf32>
    %262 = math.exp %261 : vector<8x64xf32>
    %cst_71 = arith.constant 1.000000e+00 : f32
    %263 = vector.broadcast %cst_71 : f32 to vector<8x64xf32>
    %264 = arith.addf %263, %262 : vector<8x64xf32>
    %265 = arith.divf %263, %264 : vector<8x64xf32>
    %266 = vector.extract_strided_slice %253 {offsets = [0, 128], sizes = [8, 64], strides = [1, 1]} : vector<8x256xf32> to vector<8x64xf32>
    %267 = math.tanh %266 : vector<8x64xf32>
    %268 = vector.extract_strided_slice %253 {offsets = [0, 192], sizes = [8, 64], strides = [1, 1]} : vector<8x256xf32> to vector<8x64xf32>
    %269 = arith.negf %268 : vector<8x64xf32>
    %270 = math.exp %269 : vector<8x64xf32>
    %cst_72 = arith.constant 1.000000e+00 : f32
    %271 = vector.broadcast %cst_72 : f32 to vector<8x64xf32>
    %272 = arith.addf %271, %270 : vector<8x64xf32>
    %273 = arith.divf %271, %272 : vector<8x64xf32>
    %274 = arith.mulf %265, %243 : vector<8x64xf32>
    %275 = arith.mulf %259, %267 : vector<8x64xf32>
    %276 = arith.addf %274, %275 : vector<8x64xf32>
    %277 = math.tanh %276 : vector<8x64xf32>
    %278 = arith.mulf %273, %277 : vector<8x64xf32>
    %279 = arith.index_cast %249 : i32 to index
    %c0_73 = arith.constant 0 : index
    %280 = vector.load %arg15[%279, %c0_73] : memref<64x64xf32, #tpu.memory_space<vmem>>, vector<8x64xf32>
    tpu.vector_store %arg15[%279, %c0_73], %278 {strides = array<i32>} : memref<64x64xf32, #tpu.memory_space<vmem>>, vector<8x64xf32>,
    %c8_i32_74 = arith.constant 8 : i32
    %c0_75 = arith.constant 0 : index
    %c0_76 = arith.constant 0 : index
    %281 = vector.load %arg12[%c0_75, %c0_76] : memref<8x64xf32, #tpu.memory_space<vmem>>, vector<8x64xf32>
    tpu.vector_store %arg12[%c0_75, %c0_76], %278 {strides = array<i32>} : memref<8x64xf32, #tpu.memory_space<vmem>>, vector<8x64xf32>,
    %c0_77 = arith.constant 0 : index
    %c0_78 = arith.constant 0 : index
    %282 = vector.load %arg13[%c0_77, %c0_78] : memref<8x64xf32, #tpu.memory_space<vmem>>, vector<8x64xf32>
    tpu.vector_store %arg13[%c0_77, %c0_78], %276 {strides = array<i32>} : memref<8x64xf32, #tpu.memory_space<vmem>>, vector<8x64xf32>,
    %c0_79 = arith.constant 0 : index
    %c0_80 = arith.constant 0 : index
    %283 = vector.load %arg15[%c0_79, %c0_80] : memref<64x64xf32, #tpu.memory_space<vmem>>, vector<64x64xf32>
    %c0_81 = arith.constant 0 : index
    %c0_82 = arith.constant 0 : index
    %284 = vector.load %arg9[%c0_81, %c0_82] : memref<64x128xf32, #tpu.memory_space<vmem>>, vector<64x128xf32>
    %cst_83 = arith.constant dense<0.000000e+00> : vector<64x128xf32>
    %285 = tpu.matmul %283, %284, %cst_83 {dimension_numbers = #tpu.dot_dimension_numbers<[1], [0], [0], [1], [0, 0, 1, 1], [], []>} : vector<64x64xf32>, vector<64x128xf32>, vector<64x128xf32> -> vector<64x128xf32>
    %c0_84 = arith.constant 0 : index
    %c0_85 = arith.constant 0 : index
    %286 = vector.load %arg10[%c0_84, %c0_85] : memref<1x128xf32, #tpu.memory_space<vmem>>, vector<1x128xf32>
    %287 = vector.broadcast %286 : vector<1x128xf32> to vector<64x128xf32>
    %288 = arith.addf %285, %287 : vector<64x128xf32>
    %c0_86 = arith.constant 0 : index
    %c0_87 = arith.constant 0 : index
    %289 = vector.load %arg11[%c0_86, %c0_87] : memref<64x128xf32, #tpu.memory_space<vmem>>, vector<64x128xf32>
    tpu.vector_store %arg11[%c0_86, %c0_87], %288 {strides = array<i32>} : memref<64x128xf32, #tpu.memory_space<vmem>>, vector<64x128xf32>,
    return
  }
  func.func @transform_0(%arg0: i32) -> (i32, i32) {
    %c0_i32 = arith.constant 0 : i32
    %c0_i32_0 = arith.constant 0 : i32
    %c0_i32_1 = arith.constant 0 : i32
    return %c0_i32, %c0_i32_0 : i32, i32
  }
  func.func @transform_1(%arg0: i32) -> (i32, i32) {
    %c0_i32 = arith.constant 0 : i32
    %c0_i32_0 = arith.constant 0 : i32
    %c0_i32_1 = arith.constant 0 : i32
    return %c0_i32, %c0_i32_0 : i32, i32
  }
  func.func @transform_2(%arg0: i32) -> (i32, i32) {
    %c0_i32 = arith.constant 0 : i32
    %c0_i32_0 = arith.constant 0 : i32
    %c0_i32_1 = arith.constant 0 : i32
    return %c0_i32, %c0_i32_0 : i32, i32
  }
  func.func @transform_3(%arg0: i32) -> (i32, i32) {
    %c0_i32 = arith.constant 0 : i32
    %c0_i32_0 = arith.constant 0 : i32
    %c0_i32_1 = arith.constant 0 : i32
    return %c0_i32, %c0_i32_0 : i32, i32
  }
  func.func @transform_4(%arg0: i32) -> (i32, i32) {
    %c0_i32 = arith.constant 0 : i32
    %c0_i32_0 = arith.constant 0 : i32
    %c0_i32_1 = arith.constant 0 : i32
    return %c0_i32, %c0_i32_0 : i32, i32
  }
  func.func @transform_5(%arg0: i32) -> (i32, i32) {
    %c0_i32 = arith.constant 0 : i32
    %c0_i32_0 = arith.constant 0 : i32
    %c0_i32_1 = arith.constant 0 : i32
    return %c0_i32, %c0_i32_0 : i32, i32
  }
  func.func @transform_6(%arg0: i32) -> (i32, i32) {
    %c0_i32 = arith.constant 0 : i32
    %c0_i32_0 = arith.constant 0 : i32
    %c0_i32_1 = arith.constant 0 : i32
    return %c0_i32, %c0_i32_0 : i32, i32
  }
  func.func @transform_7(%arg0: i32) -> (i32, i32) {
    %c0_i32 = arith.constant 0 : i32
    %c0_i32_0 = arith.constant 0 : i32
    %c0_i32_1 = arith.constant 0 : i32
    return %c0_i32, %c0_i32_0 : i32, i32
  }
  func.func @transform_8(%arg0: i32) -> (i32, i32) {
    %c0_i32 = arith.constant 0 : i32
    %c0_i32_0 = arith.constant 0 : i32
    %c0_i32_1 = arith.constant 0 : i32
    return %c0_i32, %c0_i32_0 : i32, i32
  }
  func.func @transform_9(%arg0: i32) -> (i32, i32) {
    %c0_i32 = arith.constant 0 : i32
    %c0_i32_0 = arith.constant 0 : i32
    %c0_i32_1 = arith.constant 0 : i32
    return %c0_i32, %c0_i32_0 : i32, i32
  }
  func.func @transform_10(%arg0: i32) -> (i32, i32) {
    %c0_i32 = arith.constant 0 : i32
    %c0_i32_0 = arith.constant 0 : i32
    %c0_i32_1 = arith.constant 0 : i32
    return %c0_i32, %c0_i32_0 : i32, i32
  }
  func.func @transform_11(%arg0: i32) -> (i32, i32) {
    %c0_i32 = arith.constant 0 : i32
    %c0_i32_0 = arith.constant 0 : i32
    %c0_i32_1 = arith.constant 0 : i32
    return %c0_i32, %c0_i32_0 : i32, i32
  }
  func.func @transform_12(%arg0: i32) -> (i32, i32) {
    %c0_i32 = arith.constant 0 : i32
    %c0_i32_0 = arith.constant 0 : i32
    %c0_i32_1 = arith.constant 0 : i32
    return %c0_i32, %c0_i32_0 : i32, i32
  }
}

</mosaic_0001>

<llo_original>
// kernel: qnet_forward.1
$region0: #{qnet_forward.1}
  #allocation0 [shape = 'u32[]', space=smem, size = 0x4, offset = 0x4, fixed_abs, tag = 'smem constant byte address 0x4 - core index']
  #allocation1 [shape = 'u32[72,128]{1,0:T(1,128)}', space=vmem, size = 0x9000, scoped, tag = 'internal scratch']
  #allocation2 [shape = 'f32[64,256]{1,0:T(8,128)}', space=vmem, size = 0x10000, scoped, tag = 'scratch operand']
  #allocation3 [shape = 'f32[64,64]{1,0:T(8,128)}', space=vmem, size = 0x8000, scoped, tag = 'scratch operand']
  %s0 = inlined_call_operand.vmem [shape: f32[64,4], index: 0, kind: input, shape index: {}]
  %s1 = inlined_call_operand.vmem [shape: f32[8,64], index: 1, kind: input, shape index: {}]
  %s2 = inlined_call_operand.vmem [shape: f32[8,64], index: 2, kind: input, shape index: {}]
  %s3 = inlined_call_operand.vmem [shape: f32[4,64], index: 3, kind: input, shape index: {}]
  %s4 = inlined_call_operand.vmem [shape: f32[1,64], index: 4, kind: input, shape index: {}]
  %s5 = inlined_call_operand.vmem [shape: f32[64,256], index: 5, kind: input, shape index: {}]
  %s6 = inlined_call_operand.vmem [shape: f32[1,256], index: 6, kind: input, shape index: {}]
  %s7 = inlined_call_operand.vmem [shape: f32[64,256], index: 7, kind: input, shape index: {}]
  %s8 = inlined_call_operand.vmem [shape: f32[64,128], index: 8, kind: input, shape index: {}]
  %s9 = inlined_call_operand.vmem [shape: f32[1,128], index: 9, kind: input, shape index: {}]
  %s10 = inlined_call_operand.vmem [shape: f32[64,128], index: 10, kind: output, shape index: {0}]
  %s11 = inlined_call_operand.vmem [shape: f32[8,64], index: 11, kind: output, shape index: {1}]
  %s12 = inlined_call_operand.vmem [shape: f32[8,64], index: 12, kind: output, shape index: {2}]
  %13 = xla_tuple %s10, %s11, %s12
  %s14 = sld [smem:[#allocation0]]
  $region66: #{qnet_forward.1} parent=0
    _
  %s16 = ssub.s32 1, %s14
  %s17 = scalar_select 0, %s16, %s14
  // Predicated region
  $region2: #{qnet_forward.1} parent=0 // pred_check
    _
  $region3: #{qnet_forward.1} parent=0 // pred_check_branch
    %19 = sbr.rel (0) target = $region5
  $region4: #{qnet_forward.1} parent=0 // pred_region
    _
  $region5: #{qnet_forward.1} parent=0 // pred_fallthru
    _
  // Predicated region
  $region6: #{qnet_forward.1} parent=0 // pred_check
    _
  $region7: #{qnet_forward.1} parent=0 // pred_check_branch
    %21 = sbr.rel (0) target = $region9
  $region8: #{qnet_forward.1} parent=0 // pred_region
    _
  $region9: #{qnet_forward.1} parent=0 // pred_fallthru
    _
  // Predicated region
  $region10: #{qnet_forward.1} parent=0 // pred_check
    _
  $region11: #{qnet_forward.1} parent=0 // pred_check_branch
    %23 = sbr.rel (0) target = $region13
  $region12: #{qnet_forward.1} parent=0 // pred_region
    _
  $region13: #{qnet_forward.1} parent=0 // pred_fallthru
    _
  // Predicated region
  $region14: #{qnet_forward.1} parent=0 // pred_check
    _
  $region15: #{qnet_forward.1} parent=0 // pred_check_branch
    %25 = sbr.rel (0) target = $region17
  $region16: #{qnet_forward.1} parent=0 // pred_region
    _
  $region17: #{qnet_forward.1} parent=0 // pred_fallthru
    _
  // Predicated region
  $region18: #{qnet_forward.1} parent=0 // pred_check
    _
  $region19: #{qnet_forward.1} parent=0 // pred_check_branch
    %27 = sbr.rel (0) target = $region21
  $region20: #{qnet_forward.1} parent=0 // pred_region
    _
  $region21: #{qnet_forward.1} parent=0 // pred_fallthru
    _
  // Predicated region
  $region22: #{qnet_forward.1} parent=0 // pred_check
    _
  $region23: #{qnet_forward.1} parent=0 // pred_check_branch
    %29 = sbr.rel (0) target = $region25
  $region24: #{qnet_forward.1} parent=0 // pred_region
    _
  $region25: #{qnet_forward.1} parent=0 // pred_fallthru
    _
  // Predicated region
  $region26: #{qnet_forward.1} parent=0 // pred_check
    _
  $region27: #{qnet_forward.1} parent=0 // pred_check_branch
    %31 = sbr.rel (0) target = $region29
  $region28: #{qnet_forward.1} parent=0 // pred_region
    _
  $region29: #{qnet_forward.1} parent=0 // pred_fallthru
    _
  // Predicated region
  $region30: #{qnet_forward.1} parent=0 // pred_check
    _
  $region31: #{qnet_forward.1} parent=0 // pred_check_branch
    %33 = sbr.rel (0) target = $region33
  $region32: #{qnet_forward.1} parent=0 // pred_region
    _
  $region33: #{qnet_forward.1} parent=0 // pred_fallthru
    _
  // Predicated region
  $region34: #{qnet_forward.1} parent=0 // pred_check
    _
  $region35: #{qnet_forward.1} parent=0 // pred_check_branch
    %35 = sbr.rel (0) target = $region37
  $region36: #{qnet_forward.1} parent=0 // pred_region
    _
  $region37: #{qnet_forward.1} parent=0 // pred_fallthru
    _
  // Predicated region
  $region38: #{qnet_forward.1} parent=0 // pred_check
    _
  $region39: #{qnet_forward.1} parent=0 // pred_check_branch
    %37 = sbr.rel (0) target = $region41
  $region40: #{qnet_forward.1} parent=0 // pred_region
    _
  $region41: #{qnet_forward.1} parent=0 // pred_fallthru
    _
  %v38 = vld [vmem:[%s0] sm:$0xff]
  %v39 = vld [vmem:[%s0 + $0x8] sm:$0xff]
  %v40 = vld [vmem:[%s0 + $0x10] sm:$0xff]
  %v41 = vld [vmem:[%s0 + $0x18] sm:$0xff]
  %v42 = vld [vmem:[%s0 + $0x20] sm:$0xff]
  %v43 = vld [vmem:[%s0 + $0x28] sm:$0xff]
  %v44 = vld [vmem:[%s0 + $0x30] sm:$0xff]
  %v45 = vld [vmem:[%s0 + $0x38] sm:$0xff]
  %v46 = vld [vmem:[%s3] sm:$0xf]
  %v47 = vld [vmem:[%s4] sm:$0x1]
  %v49 = vperm.slane %v47, 0
  %vm51 = vcmask 31744
  %v53 = vsel %vm51, %v38, 0
  %v56 = vsel %vm51, %v39, 0
  %v59 = vsel %vm51, %v40, 0
  %v62 = vsel %vm51, %v41, 0
  %v65 = vsel %vm51, %v42, 0
  %v68 = vsel %vm51, %v43, 0
  %v71 = vsel %vm51, %v44, 0
  %v74 = vsel %vm51, %v45, 0
  %vm76 = vcmask 1043456
  %v78 = vsel %vm76, %v46, 0
  %80 = vmatpush.msra.mxu0 0.0
  %81 = vmatpush.msra.mxu0 0.0
  %82 = vmatpush.msra.mxu0 0.0
  %83 = vmatpush.msra.mxu0 0.0
  %84 = vmatpush.msra.mxu0 0.0
  %85 = vmatpush.msra.mxu0 0.0
  %86 = vmatpush.msra.mxu0 0.0
  %87 = vmatpush.msra.mxu0 0.0
  %88 = vmatpush.msra.mxu0 0.0
  %89 = vmatpush.msra.mxu0 0.0
  %90 = vmatpush.msra.mxu0 0.0
  %91 = vmatpush.msra.mxu0 0.0
  %92 = vmatpush.msra.mxu0 0.0
  %93 = vmatpush.msra.mxu0 0.0
  %94 = vmatpush.msra.mxu0 0.0
  %95 = vmatpush.msra.mxu0 %v78
  %96 = vmatmul.f32.gmra.mxu0 %v53
  %v97 = vpop.f32.mrf.mxu0
  %v98 = vadd.f32 %v49, %v97
  %99 = vmatmul.f32.gmra.mxu0 %v56
  %v100 = vpop.f32.mrf.mxu0
  %v101 = vadd.f32 %v49, %v100
  %102 = vmatmul.f32.gmra.mxu0 %v59
  %v103 = vpop.f32.mrf.mxu0
  %v104 = vadd.f32 %v49, %v103
  %105 = vmatmul.f32.gmra.mxu0 %v62
  %v106 = vpop.f32.mrf.mxu0
  %v107 = vadd.f32 %v49, %v106
  %108 = vmatmul.f32.gmra.mxu0 %v65
  %v109 = vpop.f32.mrf.mxu0
  %v110 = vadd.f32 %v49, %v109
  %111 = vmatmul.f32.gmra.mxu0 %v68
  %v112 = vpop.f32.mrf.mxu0
  %v113 = vadd.f32 %v49, %v112
  %114 = vmatmul.f32.gmra.mxu0 %v71
  %v115 = vpop.f32.mrf.mxu0
  %v116 = vadd.f32 %v49, %v115
  %117 = vmatmul.f32.gmra.mxu0 %v74
  %v118 = vpop.f32.mrf.mxu0
  %v119 = vadd.f32 %v49, %v118
  %120 = vdwg.mxu0
  %v121 = vmax.f32 %v98, 0.0
  %v122 = vmax.f32 %v101, 0.0
  %v123 = vmax.f32 %v104, 0.0
  %v124 = vmax.f32 %v107, 0.0
  %v125 = vmax.f32 %v110, 0.0
  %v126 = vmax.f32 %v113, 0.0
  %v127 = vmax.f32 %v116, 0.0
  %v128 = vmax.f32 %v119, 0.0
  %v129 = vld [vmem:[%s5] sm:$0xff]
  %v130 = vld [vmem:[%s5 + $0x8] sm:$0xff]
  %v131 = vld [vmem:[%s5 + $0x10] sm:$0xff]
  %v132 = vld [vmem:[%s5 + $0x18] sm:$0xff]
  %v133 = vld [vmem:[%s5 + $0x20] sm:$0xff]
  %v134 = vld [vmem:[%s5 + $0x28] sm:$0xff]
  %v135 = vld [vmem:[%s5 + $0x30] sm:$0xff]
  %v136 = vld [vmem:[%s5 + $0x38] sm:$0xff]
  %v137 = vld [vmem:[%s5 + $0x40] sm:$0xff]
  %v138 = vld [vmem:[%s5 + $0x48] sm:$0xff]
  %v139 = vld [vmem:[%s5 + $0x50] sm:$0xff]
  %v140 = vld [vmem:[%s5 + $0x58] sm:$0xff]
  %v141 = vld [vmem:[%s5 + $0x60] sm:$0xff]
  %v142 = vld [vmem:[%s5 + $0x68] sm:$0xff]
  %v143 = vld [vmem:[%s5 + $0x70] sm:$0xff]
  %v144 = vld [vmem:[%s5 + $0x78] sm:$0xff]
  %v145 = vld [vmem:[%s6] sm:$0x3]
  %v147 = vperm.slane %v145, 0
  %v148 = vperm.slane %v145, 1
  %vm151 = vcmask 523264
  %v153 = vsel %vm151, %v121, 0
  %v156 = vsel %vm151, %v122, 0
  %v159 = vsel %vm151, %v123, 0
  %v162 = vsel %vm151, %v124, 0
  %v165 = vsel %vm151, %v125, 0
  %v168 = vsel %vm151, %v126, 0
  %v171 = vsel %vm151, %v127, 0
  %v174 = vsel %vm151, %v128, 0
  %176 = vmatpush.msra.mxu0 0.0
  %177 = vmatpush.msra.mxu0 0.0
  %178 = vmatpush.msra.mxu0 0.0
  %179 = vmatpush.msra.mxu0 0.0
  %180 = vmatpush.msra.mxu0 0.0
  %181 = vmatpush.msra.mxu0 0.0
  %182 = vmatpush.msra.mxu0 0.0
  %183 = vmatpush.msra.mxu0 0.0
  %184 = vmatpush.msra.mxu0 %v143
  %185 = vmatpush.msra.mxu0 %v141
  %186 = vmatpush.msra.mxu0 %v139
  %187 = vmatpush.msra.mxu0 %v137
  %188 = vmatpush.msra.mxu0 %v135
  %189 = vmatpush.msra.mxu0 %v133
  %190 = vmatpush.msra.mxu0 %v131
  %191 = vmatpush.msra.mxu0 %v129
  %192 = vmatmul.f32.gmra.mxu0 %v153
  %v193 = vpop.f32.mrf.mxu0
  %v194 = vadd.f32 %v147, %v193
  %195 = vmatmul.f32.gmra.mxu0 %v156
  %v196 = vpop.f32.mrf.mxu0
  %v197 = vadd.f32 %v147, %v196
  %198 = vmatmul.f32.gmra.mxu0 %v159
  %v199 = vpop.f32.mrf.mxu0
  %v200 = vadd.f32 %v147, %v199
  %201 = vmatmul.f32.gmra.mxu0 %v162
  %v202 = vpop.f32.mrf.mxu0
  %v203 = vadd.f32 %v147, %v202
  %204 = vmatmul.f32.gmra.mxu0 %v165
  %v205 = vpop.f32.mrf.mxu0
  %v206 = vadd.f32 %v147, %v205
  %207 = vmatmul.f32.gmra.mxu0 %v168
  %v208 = vpop.f32.mrf.mxu0
  %v209 = vadd.f32 %v147, %v208
  %210 = vmatmul.f32.gmra.mxu0 %v171
  %v211 = vpop.f32.mrf.mxu0
  %v212 = vadd.f32 %v147, %v211
  %213 = vmatmul.f32.gmra.mxu0 %v174
  %v214 = vpop.f32.mrf.mxu0
  %v215 = vadd.f32 %v147, %v214
  %216 = vdwg.mxu0
  %217 = vmatpush.msra.mxu0 0.0
  %218 = vmatpush.msra.mxu0 0.0
  %219 = vmatpush.msra.mxu0 0.0
  %220 = vmatpush.msra.mxu0 0.0
  %221 = vmatpush.msra.mxu0 0.0
  %222 = vmatpush.msra.mxu0 0.0
  %223 = vmatpush.msra.mxu0 0.0
  %224 = vmatpush.msra.mxu0 0.0
  %225 = vmatpush.msra.mxu0 %v144
  %226 = vmatpush.msra.mxu0 %v142
  %227 = vmatpush.msra.mxu0 %v140
  %228 = vmatpush.msra.mxu0 %v138
  %229 = vmatpush.msra.mxu0 %v136
  %230 = vmatpush.msra.mxu0 %v134
  %231 = vmatpush.msra.mxu0 %v132
  %232 = vmatpush.msra.mxu0 %v130
  %233 = vmatmul.f32.gmra.mxu0 %v153
  %v234 = vpop.f32.mrf.mxu0
  %v235 = vadd.f32 %v148, %v234
  %236 = vmatmul.f32.gmra.mxu0 %v156
  %v237 = vpop.f32.mrf.mxu0
  %v238 = vadd.f32 %v148, %v237
  %239 = vmatmul.f32.gmra.mxu0 %v159
  %v240 = vpop.f32.mrf.mxu0
  %v241 = vadd.f32 %v148, %v240
  %242 = vmatmul.f32.gmra.mxu0 %v162
  %v243 = vpop.f32.mrf.mxu0
  %v244 = vadd.f32 %v148, %v243
  %245 = vmatmul.f32.gmra.mxu0 %v165
  %v246 = vpop.f32.mrf.mxu0
  %v247 = vadd.f32 %v148, %v246
  %248 = vmatmul.f32.gmra.mxu0 %v168
  %v249 = vpop.f32.mrf.mxu0
  %v250 = vadd.f32 %v148, %v249
  %251 = vmatmul.f32.gmra.mxu0 %v171
  %v252 = vpop.f32.mrf.mxu0
  %v253 = vadd.f32 %v148, %v252
  %254 = vmatmul.f32.gmra.mxu0 %v174
  %v255 = vpop.f32.mrf.mxu0
  %v256 = vadd.f32 %v148, %v255
  %257 = vdwg.mxu0
  %258 = vst [vmem:[#allocation2] sm:$0xff] %v194
  %259 = vst [vmem:[#allocation2 + $0x8] sm:$0xff] %v235
  %260 = vst [vmem:[#allocation2 + $0x10] sm:$0xff] %v197
  %261 = vst [vmem:[#allocation2 + $0x18] sm:$0xff] %v238
  %262 = vst [vmem:[#allocation2 + $0x20] sm:$0xff] %v200
  %263 = vst [vmem:[#allocation2 + $0x28] sm:$0xff] %v241
  %264 = vst [vmem:[#allocation2 + $0x30] sm:$0xff] %v203
  %265 = vst [vmem:[#allocation2 + $0x38] sm:$0xff] %v244
  %266 = vst [vmem:[#allocation2 + $0x40] sm:$0xff] %v206
  %267 = vst [vmem:[#allocation2 + $0x48] sm:$0xff] %v247
  %268 = vst [vmem:[#allocation2 + $0x50] sm:$0xff] %v209
  %269 = vst [vmem:[#allocation2 + $0x58] sm:$0xff] %v250
  %270 = vst [vmem:[#allocation2 + $0x60] sm:$0xff] %v212
  %271 = vst [vmem:[#allocation2 + $0x68] sm:$0xff] %v253
  %272 = vst [vmem:[#allocation2 + $0x70] sm:$0xff] %v215
  %273 = vst [vmem:[#allocation2 + $0x78] sm:$0xff] %v256
  %v274 = vld [vmem:[%s7] sm:$0xff]
  %v275 = vld [vmem:[%s7 + $0x8] sm:$0xff]
  %v276 = vld [vmem:[%s7 + $0x10] sm:$0xff]
  %v277 = vld [vmem:[%s7 + $0x18] sm:$0xff]
  %v278 = vld [vmem:[%s7 + $0x20] sm:$0xff]
  %v279 = vld [vmem:[%s7 + $0x28] sm:$0xff]
  %v280 = vld [vmem:[%s7 + $0x30] sm:$0xff]
  %v281 = vld [vmem:[%s7 + $0x38] sm:$0xff]
  %v282 = vld [vmem:[%s7 + $0x40] sm:$0xff]
  %v283 = vld [vmem:[%s7 + $0x48] sm:$0xff]
  %v284 = vld [vmem:[%s7 + $0x50] sm:$0xff]
  %v285 = vld [vmem:[%s7 + $0x58] sm:$0xff]
  %v286 = vld [vmem:[%s7 + $0x60] sm:$0xff]
  %v287 = vld [vmem:[%s7 + $0x68] sm:$0xff]
  %v288 = vld [vmem:[%s7 + $0x70] sm:$0xff]
  %v289 = vld [vmem:[%s7 + $0x78] sm:$0xff]
  %v290 = vld [vmem:[%s1] sm:$0xff]
  %v291 = vld [vmem:[%s2] sm:$0xff]
  %s292 = smul.u32 0, 2
  %s293 = smul.addr %s292, 8
  %s294 = scalar_lea.vmem [#allocation2], %s293
  %v295 = vld [vmem:[%s294] sm:$0xff]
  %v296 = vld [vmem:[%s294 + $0x8] sm:$0xff]
  %v298 = vsel %vm151, %v290, 0
  %300 = vmatpush.msra.mxu0 0.0
  %301 = vmatpush.msra.mxu0 0.0
  %302 = vmatpush.msra.mxu0 0.0
  %303 = vmatpush.msra.mxu0 0.0
  %304 = vmatpush.msra.mxu0 0.0
  %305 = vmatpush.msra.mxu0 0.0
  %306 = vmatpush.msra.mxu0 0.0
  %307 = vmatpush.msra.mxu0 0.0
  %308 = vmatpush.msra.mxu0 %v288
  %309 = vmatpush.msra.mxu0 %v286
  %310 = vmatpush.msra.mxu0 %v284
  %311 = vmatpush.msra.mxu0 %v282
  %312 = vmatpush.msra.mxu0 %v280
  %313 = vmatpush.msra.mxu0 %v278
  %314 = vmatpush.msra.mxu0 %v276
  %315 = vmatpush.msra.mxu0 %v274
  %316 = vmatmul.f32.gmra.mxu0 %v298
  %v317 = vpop.f32.mrf.mxu0
  %v318 = vadd.f32 0.0, %v317
  %319 = vdwg.mxu0
  %320 = vmatpush.msra.mxu0 0.0
  %321 = vmatpush.msra.mxu0 0.0
  %322 = vmatpush.msra.mxu0 0.0
  %323 = vmatpush.msra.mxu0 0.0
  %324 = vmatpush.msra.mxu0 0.0
  %325 = vmatpush.msra.mxu0 0.0
  %326 = vmatpush.msra.mxu0 0.0
  %327 = vmatpush.msra.mxu0 0.0
  %328 = vmatpush.msra.mxu0 %v289
  %329 = vmatpush.msra.mxu0 %v287
  %330 = vmatpush.msra.mxu0 %v285
  %331 = vmatpush.msra.mxu0 %v283
  %332 = vmatpush.msra.mxu0 %v281
  %333 = vmatpush.msra.mxu0 %v279
  %334 = vmatpush.msra.mxu0 %v277
  %335 = vmatpush.msra.mxu0 %v275
  %336 = vmatmul.f32.gmra.mxu0 %v298
  %v337 = vpop.f32.mrf.mxu0
  %v338 = vadd.f32 0.0, %v337
  %339 = vdwg.mxu0
  %v340 = vadd.f32 %v295, %v318
  %v341 = vadd.f32 %v296, %v338
  %v342 = vxor.u32 %v340, 2147483648
  %v343 = vmul.f32 %v342, 1.442695
  %v344 = vpow.pop %v343
  %v345 = vadd.f32 %v344, 1.0
  %v346 = vrcp.pop %v345
  %v347 = vmul.f32 %v345, %v346
  %v348 = vsub.f32 1.0, %v347
  %v349 = vmul.f32 %v346, %v348
  %v350 = vadd.f32 %v346, %v349
  %vm351 = vweird.f32 %v345
  %vm352 = vweird.f32 %v346
  %vm353 = vmor %vm351, %vm352
  %v354 = vsel %vm353, %v346, %v350
  %v355 = vand.u32 2147483647, %v345
  %vm356 = vcmp.eq.f32.partialorder %v355, 8.507059e+37
  %v357 = vand.u32 %v345, 2147483648
  %v358 = vor.u32 1.1754944e-38, %v357
  %v359 = vsel %vm356, %v358, %v354
  %v360 = vmul.f32 1.0, %v359
  %v361 = vtanh.pop %v341
  %v362 = vxor.u32 %v341, 2147483648
  %v363 = vmul.f32 %v362, 1.442695
  %v364 = vpow.pop %v363
  %v365 = vadd.f32 %v364, 1.0
  %v366 = vrcp.pop %v365
  %v367 = vmul.f32 %v365, %v366
  %v368 = vsub.f32 1.0, %v367
  %v369 = vmul.f32 %v366, %v368
  %v370 = vadd.f32 %v366, %v369
  %vm371 = vweird.f32 %v365
  %vm372 = vweird.f32 %v366
  %vm373 = vmor %vm371, %vm372
  %v374 = vsel %vm373, %v366, %v370
  %v375 = vand.u32 2147483647, %v365
  %vm376 = vcmp.eq.f32.partialorder %v375, 8.507059e+37
  %v377 = vand.u32 %v365, 2147483648
  %v378 = vor.u32 1.1754944e-38, %v377
  %v379 = vsel %vm376, %v378, %v374
  %v380 = vmul.f32 1.0, %v379
  %382 = vrot.lane.b32.xlu0 %v291, 64
  %v383 = vpop.permute.xlu0 %382
  %v385 = vmul.f32 %v360, %v383
  %v386 = vmul.f32 %v360, %v361
  %388 = vrot.lane.b32.xlu0 %v386, 64
  %v389 = vpop.permute.xlu0 %388
  %v391 = vadd.f32 %v385, %v389
  %v392 = vtanh.pop %v391
  %v393 = vmul.f32 %v380, %v392
  %395 = vrot.lane.b32.xlu0 %v393, 64
  %v396 = vpop.permute.xlu0 %395
  %398 = vst.msk [vmem:[#allocation3] sm:$0xff] %vm151, %v396
  %s399 = smul.u32 1, 2
  %s400 = smul.addr %s399, 8
  %s401 = scalar_lea.vmem [#allocation2], %s400
  %v402 = vld [vmem:[%s401] sm:$0xff]
  %v403 = vld [vmem:[%s401 + $0x8] sm:$0xff]
  %v404 = vsel %vm151, %v396, 0
  %406 = vmatpush.msra.mxu0 0.0
  %407 = vmatpush.msra.mxu0 0.0
  %408 = vmatpush.msra.mxu0 0.0
  %409 = vmatpush.msra.mxu0 0.0
  %410 = vmatpush.msra.mxu0 0.0
  %411 = vmatpush.msra.mxu0 0.0
  %412 = vmatpush.msra.mxu0 0.0
  %413 = vmatpush.msra.mxu0 0.0
  %414 = vmatpush.msra.mxu0 %v288
  %415 = vmatpush.msra.mxu0 %v286
  %416 = vmatpush.msra.mxu0 %v284
  %417 = vmatpush.msra.mxu0 %v282
  %418 = vmatpush.msra.mxu0 %v280
  %419 = vmatpush.msra.mxu0 %v278
  %420 = vmatpush.msra.mxu0 %v276
  %421 = vmatpush.msra.mxu0 %v274
  %422 = vmatmul.f32.gmra.mxu0 %v404
  %v423 = vpop.f32.mrf.mxu0
  %v424 = vadd.f32 0.0, %v423
  %425 = vdwg.mxu0
  %426 = vmatpush.msra.mxu0 0.0
  %427 = vmatpush.msra.mxu0 0.0
  %428 = vmatpush.msra.mxu0 0.0
  %429 = vmatpush.msra.mxu0 0.0
  %430 = vmatpush.msra.mxu0 0.0
  %431 = vmatpush.msra.mxu0 0.0
  %432 = vmatpush.msra.mxu0 0.0
  %433 = vmatpush.msra.mxu0 0.0
  %434 = vmatpush.msra.mxu0 %v289
  %435 = vmatpush.msra.mxu0 %v287
  %436 = vmatpush.msra.mxu0 %v285
  %437 = vmatpush.msra.mxu0 %v283
  %438 = vmatpush.msra.mxu0 %v281
  %439 = vmatpush.msra.mxu0 %v279
  %440 = vmatpush.msra.mxu0 %v277
  %441 = vmatpush.msra.mxu0 %v275
  %442 = vmatmul.f32.gmra.mxu0 %v404
  %v443 = vpop.f32.mrf.mxu0
  %v444 = vadd.f32 0.0, %v443
  %445 = vdwg.mxu0
  %v446 = vadd.f32 %v402, %v424
  %v447 = vadd.f32 %v403, %v444
  %v448 = vxor.u32 %v446, 2147483648
  %v449 = vmul.f32 %v448, 1.442695
  %v450 = vpow.pop %v449
  %v451 = vadd.f32 %v450, 1.0
  %v452 = vrcp.pop %v451
  %v453 = vmul.f32 %v451, %v452
  %v454 = vsub.f32 1.0, %v453
  %v455 = vmul.f32 %v452, %v454
  %v456 = vadd.f32 %v452, %v455
  %vm457 = vweird.f32 %v451
  %vm458 = vweird.f32 %v452
  %vm459 = vmor %vm457, %vm458
  %v460 = vsel %vm459, %v452, %v456
  %v461 = vand.u32 2147483647, %v451
  %vm462 = vcmp.eq.f32.partialorder %v461, 8.507059e+37
  %v463 = vand.u32 %v451, 2147483648
  %v464 = vor.u32 1.1754944e-38, %v463
  %v465 = vsel %vm462, %v464, %v460
  %v466 = vmul.f32 1.0, %v465
  %v467 = vtanh.pop %v447
  %v468 = vxor.u32 %v447, 2147483648
  %v469 = vmul.f32 %v468, 1.442695
  %v470 = vpow.pop %v469
  %v471 = vadd.f32 %v470, 1.0
  %v472 = vrcp.pop %v471
  %v473 = vmul.f32 %v471, %v472
  %v474 = vsub.f32 1.0, %v473
  %v475 = vmul.f32 %v472, %v474
  %v476 = vadd.f32 %v472, %v475
  %vm477 = vweird.f32 %v471
  %vm478 = vweird.f32 %v472
  %vm479 = vmor %vm477, %vm478
  %v480 = vsel %vm479, %v472, %v476
  %v481 = vand.u32 2147483647, %v471
  %vm482 = vcmp.eq.f32.partialorder %v481, 8.507059e+37
  %v483 = vand.u32 %v471, 2147483648
  %v484 = vor.u32 1.1754944e-38, %v483
  %v485 = vsel %vm482, %v484, %v480
  %v486 = vmul.f32 1.0, %v485
  %v487 = vmul.f32 %v466, %v391
  %v488 = vmul.f32 %v466, %v467
  %490 = vrot.lane.b32.xlu0 %v488, 64
  %v491 = vpop.permute.xlu0 %490
  %v493 = vadd.f32 %v487, %v491
  %v494 = vtanh.pop %v493
  %v495 = vmul.f32 %v486, %v494
  %497 = vrot.lane.b32.xlu0 %v495, 64
  %v498 = vpop.permute.xlu0 %497
  %s500 = scalar_lea.vmem [#allocation3], 8
  %501 = vst.msk [vmem:[%s500] sm:$0xff] %vm151, %v498
  %s502 = smul.u32 2, 2
  %s503 = smul.addr %s502, 8
  %s504 = scalar_lea.vmem [#allocation2], %s503
  %v505 = vld [vmem:[%s504] sm:$0xff]
  %v506 = vld [vmem:[%s504 + $0x8] sm:$0xff]
  %v507 = vsel %vm151, %v498, 0
  %509 = vmatpush.msra.mxu0 0.0
  %510 = vmatpush.msra.mxu0 0.0
  %511 = vmatpush.msra.mxu0 0.0
  %512 = vmatpush.msra.mxu0 0.0
  %513 = vmatpush.msra.mxu0 0.0
  %514 = vmatpush.msra.mxu0 0.0
  %515 = vmatpush.msra.mxu0 0.0
  %516 = vmatpush.msra.mxu0 0.0
  %517 = vmatpush.msra.mxu0 %v288
  %518 = vmatpush.msra.mxu0 %v286
  %519 = vmatpush.msra.mxu0 %v284
  %520 = vmatpush.msra.mxu0 %v282
  %521 = vmatpush.msra.mxu0 %v280
  %522 = vmatpush.msra.mxu0 %v278
  %523 = vmatpush.msra.mxu0 %v276
  %524 = vmatpush.msra.mxu0 %v274
  %525 = vmatmul.f32.gmra.mxu0 %v507
  %v526 = vpop.f32.mrf.mxu0
  %v527 = vadd.f32 0.0, %v526
  %528 = vdwg.mxu0
  %529 = vmatpush.msra.mxu0 0.0
  %530 = vmatpush.msra.mxu0 0.0
  %531 = vmatpush.msra.mxu0 0.0
  %532 = vmatpush.msra.mxu0 0.0
  %533 = vmatpush.msra.mxu0 0.0
  %534 = vmatpush.msra.mxu0 0.0
  %535 = vmatpush.msra.mxu0 0.0
  %536 = vmatpush.msra.mxu0 0.0
  %537 = vmatpush.msra.mxu0 %v289
  %538 = vmatpush.msra.mxu0 %v287
  %539 = vmatpush.msra.mxu0 %v285
  %540 = vmatpush.msra.mxu0 %v283
  %541 = vmatpush.msra.mxu0 %v281
  %542 = vmatpush.msra.mxu0 %v279
  %543 = vmatpush.msra.mxu0 %v277
  %544 = vmatpush.msra.mxu0 %v275
  %545 = vmatmul.f32.gmra.mxu0 %v507
  %v546 = vpop.f32.mrf.mxu0
  %v547 = vadd.f32 0.0, %v546
  %548 = vdwg.mxu0
  %v549 = vadd.f32 %v505, %v527
  %v550 = vadd.f32 %v506, %v547
  %v551 = vxor.u32 %v549, 2147483648
  %v552 = vmul.f32 %v551, 1.442695
  %v553 = vpow.pop %v552
  %v554 = vadd.f32 %v553, 1.0
  %v555 = vrcp.pop %v554
  %v556 = vmul.f32 %v554, %v555
  %v557 = vsub.f32 1.0, %v556
  %v558 = vmul.f32 %v555, %v557
  %v559 = vadd.f32 %v555, %v558
  %vm560 = vweird.f32 %v554
  %vm561 = vweird.f32 %v555
  %vm562 = vmor %vm560, %vm561
  %v563 = vsel %vm562, %v555, %v559
  %v564 = vand.u32 2147483647, %v554
  %vm565 = vcmp.eq.f32.partialorder %v564, 8.507059e+37
  %v566 = vand.u32 %v554, 2147483648
  %v567 = vor.u32 1.1754944e-38, %v566
  %v568 = vsel %vm565, %v567, %v563
  %v569 = vmul.f32 1.0, %v568
  %v570 = vtanh.pop %v550
  %v571 = vxor.u32 %v550, 2147483648
  %v572 = vmul.f32 %v571, 1.442695
  %v573 = vpow.pop %v572
  %v574 = vadd.f32 %v573, 1.0
  %v575 = vrcp.pop %v574
  %v576 = vmul.f32 %v574, %v575
  %v577 = vsub.f32 1.0, %v576
  %v578 = vmul.f32 %v575, %v577
  %v579 = vadd.f32 %v575, %v578
  %vm580 = vweird.f32 %v574
  %vm581 = vweird.f32 %v575
  %vm582 = vmor %vm580, %vm581
  %v583 = vsel %vm582, %v575, %v579
  %v584 = vand.u32 2147483647, %v574
  %vm585 = vcmp.eq.f32.partialorder %v584, 8.507059e+37
  %v586 = vand.u32 %v574, 2147483648
  %v587 = vor.u32 1.1754944e-38, %v586
  %v588 = vsel %vm585, %v587, %v583
  %v589 = vmul.f32 1.0, %v588
  %v590 = vmul.f32 %v569, %v493
  %v591 = vmul.f32 %v569, %v570
  %593 = vrot.lane.b32.xlu0 %v591, 64
  %v594 = vpop.permute.xlu0 %593
  %v596 = vadd.f32 %v590, %v594
  %v597 = vtanh.pop %v596
  %v598 = vmul.f32 %v589, %v597
  %600 = vrot.lane.b32.xlu0 %v598, 64
  %v601 = vpop.permute.xlu0 %600
  %s603 = scalar_lea.vmem [#allocation3], 16
  %604 = vst.msk [vmem:[%s603] sm:$0xff] %vm151, %v601
  %s605 = smul.u32 3, 2
  %s606 = smul.addr %s605, 8
  %s607 = scalar_lea.vmem [#allocation2], %s606
  %v608 = vld [vmem:[%s607] sm:$0xff]
  %v609 = vld [vmem:[%s607 + $0x8] sm:$0xff]
  %v610 = vsel %vm151, %v601, 0
  %612 = vmatpush.msra.mxu0 0.0
  %613 = vmatpush.msra.mxu0 0.0
  %614 = vmatpush.msra.mxu0 0.0
  %615 = vmatpush.msra.mxu0 0.0
  %616 = vmatpush.msra.mxu0 0.0
  %617 = vmatpush.msra.mxu0 0.0
  %618 = vmatpush.msra.mxu0 0.0
  %619 = vmatpush.msra.mxu0 0.0
  %620 = vmatpush.msra.mxu0 %v288
  %621 = vmatpush.msra.mxu0 %v286
  %622 = vmatpush.msra.mxu0 %v284
  %623 = vmatpush.msra.mxu0 %v282
  %624 = vmatpush.msra.mxu0 %v280
  %625 = vmatpush.msra.mxu0 %v278
  %626 = vmatpush.msra.mxu0 %v276
  %627 = vmatpush.msra.mxu0 %v274
  %628 = vmatmul.f32.gmra.mxu0 %v610
  %v629 = vpop.f32.mrf.mxu0
  %v630 = vadd.f32 0.0, %v629
  %631 = vdwg.mxu0
  %632 = vmatpush.msra.mxu0 0.0
  %633 = vmatpush.msra.mxu0 0.0
  %634 = vmatpush.msra.mxu0 0.0
  %635 = vmatpush.msra.mxu0 0.0
  %636 = vmatpush.msra.mxu0 0.0
  %637 = vmatpush.msra.mxu0 0.0
  %638 = vmatpush.msra.mxu0 0.0
  %639 = vmatpush.msra.mxu0 0.0
  %640 = vmatpush.msra.mxu0 %v289
  %641 = vmatpush.msra.mxu0 %v287
  %642 = vmatpush.msra.mxu0 %v285
  %643 = vmatpush.msra.mxu0 %v283
  %644 = vmatpush.msra.mxu0 %v281
  %645 = vmatpush.msra.mxu0 %v279
  %646 = vmatpush.msra.mxu0 %v277
  %647 = vmatpush.msra.mxu0 %v275
  %648 = vmatmul.f32.gmra.mxu0 %v610
  %v649 = vpop.f32.mrf.mxu0
  %v650 = vadd.f32 0.0, %v649
  %651 = vdwg.mxu0
  %v652 = vadd.f32 %v608, %v630
  %v653 = vadd.f32 %v609, %v650
  %v654 = vxor.u32 %v652, 2147483648
  %v655 = vmul.f32 %v654, 1.442695
  %v656 = vpow.pop %v655
  %v657 = vadd.f32 %v656, 1.0
  %v658 = vrcp.pop %v657
  %v659 = vmul.f32 %v657, %v658
  %v660 = vsub.f32 1.0, %v659
  %v661 = vmul.f32 %v658, %v660
  %v662 = vadd.f32 %v658, %v661
  %vm663 = vweird.f32 %v657
  %vm664 = vweird.f32 %v658
  %vm665 = vmor %vm663, %vm664
  %v666 = vsel %vm665, %v658, %v662
  %v667 = vand.u32 2147483647, %v657
  %vm668 = vcmp.eq.f32.partialorder %v667, 8.507059e+37
  %v669 = vand.u32 %v657, 2147483648
  %v670 = vor.u32 1.1754944e-38, %v669
  %v671 = vsel %vm668, %v670, %v666
  %v672 = vmul.f32 1.0, %v671
  %v673 = vtanh.pop %v653
  %v674 = vxor.u32 %v653, 2147483648
  %v675 = vmul.f32 %v674, 1.442695
  %v676 = vpow.pop %v675
  %v677 = vadd.f32 %v676, 1.0
  %v678 = vrcp.pop %v677
  %v679 = vmul.f32 %v677, %v678
  %v680 = vsub.f32 1.0, %v679
  %v681 = vmul.f32 %v678, %v680
  %v682 = vadd.f32 %v678, %v681
  %vm683 = vweird.f32 %v677
  %vm684 = vweird.f32 %v678
  %vm685 = vmor %vm683, %vm684
  %v686 = vsel %vm685, %v678, %v682
  %v687 = vand.u32 2147483647, %v677
  %vm688 = vcmp.eq.f32.partialorder %v687, 8.507059e+37
  %v689 = vand.u32 %v677, 2147483648
  %v690 = vor.u32 1.1754944e-38, %v689
  %v691 = vsel %vm688, %v690, %v686
  %v692 = vmul.f32 1.0, %v691
  %v693 = vmul.f32 %v672, %v596
  %v694 = vmul.f32 %v672, %v673
  %696 = vrot.lane.b32.xlu0 %v694, 64
  %v697 = vpop.permute.xlu0 %696
  %v699 = vadd.f32 %v693, %v697
  %v700 = vtanh.pop %v699
  %v701 = vmul.f32 %v692, %v700
  %703 = vrot.lane.b32.xlu0 %v701, 64
  %v704 = vpop.permute.xlu0 %703
  %s706 = scalar_lea.vmem [#allocation3], 24
  %707 = vst.msk [vmem:[%s706] sm:$0xff] %vm151, %v704
  %s708 = smul.u32 4, 2
  %s709 = smul.addr %s708, 8
  %s710 = scalar_lea.vmem [#allocation2], %s709
  %v711 = vld [vmem:[%s710] sm:$0xff]
  %v712 = vld [vmem:[%s710 + $0x8] sm:$0xff]
  %v713 = vsel %vm151, %v704, 0
  %715 = vmatpush.msra.mxu0 0.0
  %716 = vmatpush.msra.mxu0 0.0
  %717 = vmatpush.msra.mxu0 0.0
  %718 = vmatpush.msra.mxu0 0.0
  %719 = vmatpush.msra.mxu0 0.0
  %720 = vmatpush.msra.mxu0 0.0
  %721 = vmatpush.msra.mxu0 0.0
  %722 = vmatpush.msra.mxu0 0.0
  %723 = vmatpush.msra.mxu0 %v288
  %724 = vmatpush.msra.mxu0 %v286
  %725 = vmatpush.msra.mxu0 %v284
  %726 = vmatpush.msra.mxu0 %v282
  %727 = vmatpush.msra.mxu0 %v280
  %728 = vmatpush.msra.mxu0 %v278
  %729 = vmatpush.msra.mxu0 %v276
  %730 = vmatpush.msra.mxu0 %v274
  %731 = vmatmul.f32.gmra.mxu0 %v713
  %v732 = vpop.f32.mrf.mxu0
  %v733 = vadd.f32 0.0, %v732
  %734 = vdwg.mxu0
  %735 = vmatpush.msra.mxu0 0.0
  %736 = vmatpush.msra.mxu0 0.0
  %737 = vmatpush.msra.mxu0 0.0
  %738 = vmatpush.msra.mxu0 0.0
  %739 = vmatpush.msra.mxu0 0.0
  %740 = vmatpush.msra.mxu0 0.0
  %741 = vmatpush.msra.mxu0 0.0
  %742 = vmatpush.msra.mxu0 0.0
  %743 = vmatpush.msra.mxu0 %v289
  %744 = vmatpush.msra.mxu0 %v287
  %745 = vmatpush.msra.mxu0 %v285
  %746 = vmatpush.msra.mxu0 %v283
  %747 = vmatpush.msra.mxu0 %v281
  %748 = vmatpush.msra.mxu0 %v279
  %749 = vmatpush.msra.mxu0 %v277
  %750 = vmatpush.msra.mxu0 %v275
  %751 = vmatmul.f32.gmra.mxu0 %v713
  %v752 = vpop.f32.mrf.mxu0
  %v753 = vadd.f32 0.0, %v752
  %754 = vdwg.mxu0
  %v755 = vadd.f32 %v711, %v733
  %v756 = vadd.f32 %v712, %v753
  %v757 = vxor.u32 %v755, 2147483648
  %v758 = vmul.f32 %v757, 1.442695
  %v759 = vpow.pop %v758
  %v760 = vadd.f32 %v759, 1.0
  %v761 = vrcp.pop %v760
  %v762 = vmul.f32 %v760, %v761
  %v763 = vsub.f32 1.0, %v762
  %v764 = vmul.f32 %v761, %v763
  %v765 = vadd.f32 %v761, %v764
  %vm766 = vweird.f32 %v760
  %vm767 = vweird.f32 %v761
  %vm768 = vmor %vm766, %vm767
  %v769 = vsel %vm768, %v761, %v765
  %v770 = vand.u32 2147483647, %v760
  %vm771 = vcmp.eq.f32.partialorder %v770, 8.507059e+37
  %v772 = vand.u32 %v760, 2147483648
  %v773 = vor.u32 1.1754944e-38, %v772
  %v774 = vsel %vm771, %v773, %v769
  %v775 = vmul.f32 1.0, %v774
  %v776 = vtanh.pop %v756
  %v777 = vxor.u32 %v756, 2147483648
  %v778 = vmul.f32 %v777, 1.442695
  %v779 = vpow.pop %v778
  %v780 = vadd.f32 %v779, 1.0
  %v781 = vrcp.pop %v780
  %v782 = vmul.f32 %v780, %v781
  %v783 = vsub.f32 1.0, %v782
  %v784 = vmul.f32 %v781, %v783
  %v785 = vadd.f32 %v781, %v784
  %vm786 = vweird.f32 %v780
  %vm787 = vweird.f32 %v781
  %vm788 = vmor %vm786, %vm787
  %v789 = vsel %vm788, %v781, %v785
  %v790 = vand.u32 2147483647, %v780
  %vm791 = vcmp.eq.f32.partialorder %v790, 8.507059e+37
  %v792 = vand.u32 %v780, 2147483648
  %v793 = vor.u32 1.1754944e-38, %v792
  %v794 = vsel %vm791, %v793, %v789
  %v795 = vmul.f32 1.0, %v794
  %v796 = vmul.f32 %v775, %v699
  %v797 = vmul.f32 %v775, %v776
  %799 = vrot.lane.b32.xlu0 %v797, 64
  %v800 = vpop.permute.xlu0 %799
  %v802 = vadd.f32 %v796, %v800
  %v803 = vtanh.pop %v802
  %v804 = vmul.f32 %v795, %v803
  %806 = vrot.lane.b32.xlu0 %v804, 64
  %v807 = vpop.permute.xlu0 %806
  %s809 = scalar_lea.vmem [#allocation3], 32
  %810 = vst.msk [vmem:[%s809] sm:$0xff] %vm151, %v807
  %s811 = smul.u32 5, 2
  %s812 = smul.addr %s811, 8
  %s813 = scalar_lea.vmem [#allocation2], %s812
  %v814 = vld [vmem:[%s813] sm:$0xff]
  %v815 = vld [vmem:[%s813 + $0x8] sm:$0xff]
  %v816 = vsel %vm151, %v807, 0
  %818 = vmatpush.msra.mxu0 0.0
  %819 = vmatpush.msra.mxu0 0.0
  %820 = vmatpush.msra.mxu0 0.0
  %821 = vmatpush.msra.mxu0 0.0
  %822 = vmatpush.msra.mxu0 0.0
  %823 = vmatpush.msra.mxu0 0.0
  %824 = vmatpush.msra.mxu0 0.0
  %825 = vmatpush.msra.mxu0 0.0
  %826 = vmatpush.msra.mxu0 %v288
  %827 = vmatpush.msra.mxu0 %v286
  %828 = vmatpush.msra.mxu0 %v284
  %829 = vmatpush.msra.mxu0 %v282
  %830 = vmatpush.msra.mxu0 %v280
  %831 = vmatpush.msra.mxu0 %v278
  %832 = vmatpush.msra.mxu0 %v276
  %833 = vmatpush.msra.mxu0 %v274
  %834 = vmatmul.f32.gmra.mxu0 %v816
  %v835 = vpop.f32.mrf.mxu0
  %v836 = vadd.f32 0.0, %v835
  %837 = vdwg.mxu0
  %838 = vmatpush.msra.mxu0 0.0
  %839 = vmatpush.msra.mxu0 0.0
  %840 = vmatpush.msra.mxu0 0.0
  %841 = vmatpush.msra.mxu0 0.0
  %842 = vmatpush.msra.mxu0 0.0
  %843 = vmatpush.msra.mxu0 0.0
  %844 = vmatpush.msra.mxu0 0.0
  %845 = vmatpush.msra.mxu0 0.0
  %846 = vmatpush.msra.mxu0 %v289
  %847 = vmatpush.msra.mxu0 %v287
  %848 = vmatpush.msra.mxu0 %v285
  %849 = vmatpush.msra.mxu0 %v283
  %850 = vmatpush.msra.mxu0 %v281
  %851 = vmatpush.msra.mxu0 %v279
  %852 = vmatpush.msra.mxu0 %v277
  %853 = vmatpush.msra.mxu0 %v275
  %854 = vmatmul.f32.gmra.mxu0 %v816
  %v855 = vpop.f32.mrf.mxu0
  %v856 = vadd.f32 0.0, %v855
  %857 = vdwg.mxu0
  %v858 = vadd.f32 %v814, %v836
  %v859 = vadd.f32 %v815, %v856
  %v860 = vxor.u32 %v858, 2147483648
  %v861 = vmul.f32 %v860, 1.442695
  %v862 = vpow.pop %v861
  %v863 = vadd.f32 %v862, 1.0
  %v864 = vrcp.pop %v863
  %v865 = vmul.f32 %v863, %v864
  %v866 = vsub.f32 1.0, %v865
  %v867 = vmul.f32 %v864, %v866
  %v868 = vadd.f32 %v864, %v867
  %vm869 = vweird.f32 %v863
  %vm870 = vweird.f32 %v864
  %vm871 = vmor %vm869, %vm870
  %v872 = vsel %vm871, %v864, %v868
  %v873 = vand.u32 2147483647, %v863
  %vm874 = vcmp.eq.f32.partialorder %v873, 8.507059e+37
  %v875 = vand.u32 %v863, 2147483648
  %v876 = vor.u32 1.1754944e-38, %v875
  %v877 = vsel %vm874, %v876, %v872
  %v878 = vmul.f32 1.0, %v877
  %v879 = vtanh.pop %v859
  %v880 = vxor.u32 %v859, 2147483648
  %v881 = vmul.f32 %v880, 1.442695
  %v882 = vpow.pop %v881
  %v883 = vadd.f32 %v882, 1.0
  %v884 = vrcp.pop %v883
  %v885 = vmul.f32 %v883, %v884
  %v886 = vsub.f32 1.0, %v885
  %v887 = vmul.f32 %v884, %v886
  %v888 = vadd.f32 %v884, %v887
  %vm889 = vweird.f32 %v883
  %vm890 = vweird.f32 %v884
  %vm891 = vmor %vm889, %vm890
  %v892 = vsel %vm891, %v884, %v888
  %v893 = vand.u32 2147483647, %v883
  %vm894 = vcmp.eq.f32.partialorder %v893, 8.507059e+37
  %v895 = vand.u32 %v883, 2147483648
  %v896 = vor.u32 1.1754944e-38, %v895
  %v897 = vsel %vm894, %v896, %v892
  %v898 = vmul.f32 1.0, %v897
  %v899 = vmul.f32 %v878, %v802
  %v900 = vmul.f32 %v878, %v879
  %902 = vrot.lane.b32.xlu0 %v900, 64
  %v903 = vpop.permute.xlu0 %902
  %v905 = vadd.f32 %v899, %v903
  %v906 = vtanh.pop %v905
  %v907 = vmul.f32 %v898, %v906
  %909 = vrot.lane.b32.xlu0 %v907, 64
  %v910 = vpop.permute.xlu0 %909
  %s912 = scalar_lea.vmem [#allocation3], 40
  %913 = vst.msk [vmem:[%s912] sm:$0xff] %vm151, %v910
  %s914 = smul.u32 6, 2
  %s915 = smul.addr %s914, 8
  %s916 = scalar_lea.vmem [#allocation2], %s915
  %v917 = vld [vmem:[%s916] sm:$0xff]
  %v918 = vld [vmem:[%s916 + $0x8] sm:$0xff]
  %v919 = vsel %vm151, %v910, 0
  %921 = vmatpush.msra.mxu0 0.0
  %922 = vmatpush.msra.mxu0 0.0
  %923 = vmatpush.msra.mxu0 0.0
  %924 = vmatpush.msra.mxu0 0.0
  %925 = vmatpush.msra.mxu0 0.0
  %926 = vmatpush.msra.mxu0 0.0
  %927 = vmatpush.msra.mxu0 0.0
  %928 = vmatpush.msra.mxu0 0.0
  %929 = vmatpush.msra.mxu0 %v288
  %930 = vmatpush.msra.mxu0 %v286
  %931 = vmatpush.msra.mxu0 %v284
  %932 = vmatpush.msra.mxu0 %v282
  %933 = vmatpush.msra.mxu0 %v280
  %934 = vmatpush.msra.mxu0 %v278
  %935 = vmatpush.msra.mxu0 %v276
  %936 = vmatpush.msra.mxu0 %v274
  %937 = vmatmul.f32.gmra.mxu0 %v919
  %v938 = vpop.f32.mrf.mxu0
  %v939 = vadd.f32 0.0, %v938
  %940 = vdwg.mxu0
  %941 = vmatpush.msra.mxu0 0.0
  %942 = vmatpush.msra.mxu0 0.0
  %943 = vmatpush.msra.mxu0 0.0
  %944 = vmatpush.msra.mxu0 0.0
  %945 = vmatpush.msra.mxu0 0.0
  %946 = vmatpush.msra.mxu0 0.0
  %947 = vmatpush.msra.mxu0 0.0
  %948 = vmatpush.msra.mxu0 0.0
  %949 = vmatpush.msra.mxu0 %v289
  %950 = vmatpush.msra.mxu0 %v287
  %951 = vmatpush.msra.mxu0 %v285
  %952 = vmatpush.msra.mxu0 %v283
  %953 = vmatpush.msra.mxu0 %v281
  %954 = vmatpush.msra.mxu0 %v279
  %955 = vmatpush.msra.mxu0 %v277
  %956 = vmatpush.msra.mxu0 %v275
  %957 = vmatmul.f32.gmra.mxu0 %v919
  %v958 = vpop.f32.mrf.mxu0
  %v959 = vadd.f32 0.0, %v958
  %960 = vdwg.mxu0
  %v961 = vadd.f32 %v917, %v939
  %v962 = vadd.f32 %v918, %v959
  %v963 = vxor.u32 %v961, 2147483648
  %v964 = vmul.f32 %v963, 1.442695
  %v965 = vpow.pop %v964
  %v966 = vadd.f32 %v965, 1.0
  %v967 = vrcp.pop %v966
  %v968 = vmul.f32 %v966, %v967
  %v969 = vsub.f32 1.0, %v968
  %v970 = vmul.f32 %v967, %v969
  %v971 = vadd.f32 %v967, %v970
  %vm972 = vweird.f32 %v966
  %vm973 = vweird.f32 %v967
  %vm974 = vmor %vm972, %vm973
  %v975 = vsel %vm974, %v967, %v971
  %v976 = vand.u32 2147483647, %v966
  %vm977 = vcmp.eq.f32.partialorder %v976, 8.507059e+37
  %v978 = vand.u32 %v966, 2147483648
  %v979 = vor.u32 1.1754944e-38, %v978
  %v980 = vsel %vm977, %v979, %v975
  %v981 = vmul.f32 1.0, %v980
  %v982 = vtanh.pop %v962
  %v983 = vxor.u32 %v962, 2147483648
  %v984 = vmul.f32 %v983, 1.442695
  %v985 = vpow.pop %v984
  %v986 = vadd.f32 %v985, 1.0
  %v987 = vrcp.pop %v986
  %v988 = vmul.f32 %v986, %v987
  %v989 = vsub.f32 1.0, %v988
  %v990 = vmul.f32 %v987, %v989
  %v991 = vadd.f32 %v987, %v990
  %vm992 = vweird.f32 %v986
  %vm993 = vweird.f32 %v987
  %vm994 = vmor %vm992, %vm993
  %v995 = vsel %vm994, %v987, %v991
  %v996 = vand.u32 2147483647, %v986
  %vm997 = vcmp.eq.f32.partialorder %v996, 8.507059e+37
  %v998 = vand.u32 %v986, 2147483648
  %v999 = vor.u32 1.1754944e-38, %v998
  %v1000 = vsel %vm997, %v999, %v995
  %v1001 = vmul.f32 1.0, %v1000
  %v1002 = vmul.f32 %v981, %v905
  %v1003 = vmul.f32 %v981, %v982
  %1005 = vrot.lane.b32.xlu0 %v1003, 64
  %v1006 = vpop.permute.xlu0 %1005
  %v1008 = vadd.f32 %v1002, %v1006
  %v1009 = vtanh.pop %v1008
  %v1010 = vmul.f32 %v1001, %v1009
  %1012 = vrot.lane.b32.xlu0 %v1010, 64
  %v1013 = vpop.permute.xlu0 %1012
  %s1015 = scalar_lea.vmem [#allocation3], 48
  %1016 = vst.msk [vmem:[%s1015] sm:$0xff] %vm151, %v1013
  %s1017 = smul.u32 7, 2
  %s1018 = smul.addr %s1017, 8
  %s1019 = scalar_lea.vmem [#allocation2], %s1018
  %v1020 = vld [vmem:[%s1019] sm:$0xff]
  %v1021 = vld [vmem:[%s1019 + $0x8] sm:$0xff]
  %v1022 = vsel %vm151, %v1013, 0
  %1024 = vmatpush.msra.mxu0 0.0
  %1025 = vmatpush.msra.mxu0 0.0
  %1026 = vmatpush.msra.mxu0 0.0
  %1027 = vmatpush.msra.mxu0 0.0
  %1028 = vmatpush.msra.mxu0 0.0
  %1029 = vmatpush.msra.mxu0 0.0
  %1030 = vmatpush.msra.mxu0 0.0
  %1031 = vmatpush.msra.mxu0 0.0
  %1032 = vmatpush.msra.mxu0 %v288
  %1033 = vmatpush.msra.mxu0 %v286
  %1034 = vmatpush.msra.mxu0 %v284
  %1035 = vmatpush.msra.mxu0 %v282
  %1036 = vmatpush.msra.mxu0 %v280
  %1037 = vmatpush.msra.mxu0 %v278
  %1038 = vmatpush.msra.mxu0 %v276
  %1039 = vmatpush.msra.mxu0 %v274
  %1040 = vmatmul.f32.gmra.mxu0 %v1022
  %v1041 = vpop.f32.mrf.mxu0
  %v1042 = vadd.f32 0.0, %v1041
  %1043 = vdwg.mxu0
  %1044 = vmatpush.msra.mxu0 0.0
  %1045 = vmatpush.msra.mxu0 0.0
  %1046 = vmatpush.msra.mxu0 0.0
  %1047 = vmatpush.msra.mxu0 0.0
  %1048 = vmatpush.msra.mxu0 0.0
  %1049 = vmatpush.msra.mxu0 0.0
  %1050 = vmatpush.msra.mxu0 0.0
  %1051 = vmatpush.msra.mxu0 0.0
  %1052 = vmatpush.msra.mxu0 %v289
  %1053 = vmatpush.msra.mxu0 %v287
  %1054 = vmatpush.msra.mxu0 %v285
  %1055 = vmatpush.msra.mxu0 %v283
  %1056 = vmatpush.msra.mxu0 %v281
  %1057 = vmatpush.msra.mxu0 %v279
  %1058 = vmatpush.msra.mxu0 %v277
  %1059 = vmatpush.msra.mxu0 %v275
  %1060 = vmatmul.f32.gmra.mxu0 %v1022
  %v1061 = vpop.f32.mrf.mxu0
  %v1062 = vadd.f32 0.0, %v1061
  %1063 = vdwg.mxu0
  %v1064 = vadd.f32 %v1020, %v1042
  %v1065 = vadd.f32 %v1021, %v1062
  %v1066 = vxor.u32 %v1064, 2147483648
  %v1067 = vmul.f32 %v1066, 1.442695
  %v1068 = vpow.pop %v1067
  %v1069 = vadd.f32 %v1068, 1.0
  %v1070 = vrcp.pop %v1069
  %v1071 = vmul.f32 %v1069, %v1070
  %v1072 = vsub.f32 1.0, %v1071
  %v1073 = vmul.f32 %v1070, %v1072
  %v1074 = vadd.f32 %v1070, %v1073
  %vm1075 = vweird.f32 %v1069
  %vm1076 = vweird.f32 %v1070
  %vm1077 = vmor %vm1075, %vm1076
  %v1078 = vsel %vm1077, %v1070, %v1074
  %v1079 = vand.u32 2147483647, %v1069
  %vm1080 = vcmp.eq.f32.partialorder %v1079, 8.507059e+37
  %v1081 = vand.u32 %v1069, 2147483648
  %v1082 = vor.u32 1.1754944e-38, %v1081
  %v1083 = vsel %vm1080, %v1082, %v1078
  %v1084 = vmul.f32 1.0, %v1083
  %v1085 = vtanh.pop %v1065
  %v1086 = vxor.u32 %v1065, 2147483648
  %v1087 = vmul.f32 %v1086, 1.442695
  %v1088 = vpow.pop %v1087
  %v1089 = vadd.f32 %v1088, 1.0
  %v1090 = vrcp.pop %v1089
  %v1091 = vmul.f32 %v1089, %v1090
  %v1092 = vsub.f32 1.0, %v1091
  %v1093 = vmul.f32 %v1090, %v1092
  %v1094 = vadd.f32 %v1090, %v1093
  %vm1095 = vweird.f32 %v1089
  %vm1096 = vweird.f32 %v1090
  %vm1097 = vmor %vm1095, %vm1096
  %v1098 = vsel %vm1097, %v1090, %v1094
  %v1099 = vand.u32 2147483647, %v1089
  %vm1100 = vcmp.eq.f32.partialorder %v1099, 8.507059e+37
  %v1101 = vand.u32 %v1089, 2147483648
  %v1102 = vor.u32 1.1754944e-38, %v1101
  %v1103 = vsel %vm1100, %v1102, %v1098
  %v1104 = vmul.f32 1.0, %v1103
  %v1105 = vmul.f32 %v1084, %v1008
  %v1106 = vmul.f32 %v1084, %v1085
  %1108 = vrot.lane.b32.xlu0 %v1106, 64
  %v1109 = vpop.permute.xlu0 %1108
  %v1111 = vadd.f32 %v1105, %v1109
  %v1112 = vtanh.pop %v1111
  %v1113 = vmul.f32 %v1104, %v1112
  %1115 = vrot.lane.b32.xlu0 %v1113, 64
  %v1116 = vpop.permute.xlu0 %1115
  %s1118 = scalar_lea.vmem [#allocation3], 56
  %1119 = vst.msk [vmem:[%s1118] sm:$0xff] %vm151, %v1116
  %1120 = vst.msk [vmem:[%s11] sm:$0xff] %vm151, %v1116
  %1122 = vrot.lane.b32.xlu0 %v1111, 64
  %v1123 = vpop.permute.xlu0 %1122
  %1125 = vst.msk [vmem:[%s12] sm:$0xff] %vm151, %v1123
  %v1126 = vld [vmem:[#allocation3] sm:$0xff]
  %v1127 = vld [vmem:[#allocation3 + $0x8] sm:$0xff]
  %v1128 = vld [vmem:[#allocation3 + $0x10] sm:$0xff]
  %v1129 = vld [vmem:[#allocation3 + $0x18] sm:$0xff]
  %v1130 = vld [vmem:[#allocation3 + $0x20] sm:$0xff]
  %v1131 = vld [vmem:[#allocation3 + $0x28] sm:$0xff]
  %v1132 = vld [vmem:[#allocation3 + $0x30] sm:$0xff]
  %v1133 = vld [vmem:[#allocation3 + $0x38] sm:$0xff]
  %v1134 = vld [vmem:[%s8] sm:$0xff]
  %v1135 = vld [vmem:[%s8 + $0x8] sm:$0xff]
  %v1136 = vld [vmem:[%s8 + $0x10] sm:$0xff]
  %v1137 = vld [vmem:[%s8 + $0x18] sm:$0xff]
  %v1138 = vld [vmem:[%s8 + $0x20] sm:$0xff]
  %v1139 = vld [vmem:[%s8 + $0x28] sm:$0xff]
  %v1140 = vld [vmem:[%s8 + $0x30] sm:$0xff]
  %v1141 = vld [vmem:[%s8 + $0x38] sm:$0xff]
  %v1142 = vld [vmem:[%s9] sm:$0x1]
  %v1144 = vperm.slane %v1142, 0
  %v1147 = vsel %vm151, %v1126, 0
  %v1150 = vsel %vm151, %v1127, 0
  %v1153 = vsel %vm151, %v1128, 0
  %v1156 = vsel %vm151, %v1129, 0
  %v1159 = vsel %vm151, %v1130, 0
  %v1162 = vsel %vm151, %v1131, 0
  %v1165 = vsel %vm151, %v1132, 0
  %v1168 = vsel %vm151, %v1133, 0
  %1170 = vmatpush.msra.mxu0 0.0
  %1171 = vmatpush.msra.mxu0 0.0
  %1172 = vmatpush.msra.mxu0 0.0
  %1173 = vmatpush.msra.mxu0 0.0
  %1174 = vmatpush.msra.mxu0 0.0
  %1175 = vmatpush.msra.mxu0 0.0
  %1176 = vmatpush.msra.mxu0 0.0
  %1177 = vmatpush.msra.mxu0 0.0
  %1178 = vmatpush.msra.mxu0 %v1141
  %1179 = vmatpush.msra.mxu0 %v1140
  %1180 = vmatpush.msra.mxu0 %v1139
  %1181 = vmatpush.msra.mxu0 %v1138
  %1182 = vmatpush.msra.mxu0 %v1137
  %1183 = vmatpush.msra.mxu0 %v1136
  %1184 = vmatpush.msra.mxu0 %v1135
  %1185 = vmatpush.msra.mxu0 %v1134
  %1186 = vmatmul.f32.gmra.mxu0 %v1147
  %v1187 = vpop.f32.mrf.mxu0
  %v1188 = vadd.f32 %v1144, %v1187
  %1189 = vmatmul.f32.gmra.mxu0 %v1150
  %v1190 = vpop.f32.mrf.mxu0
  %v1191 = vadd.f32 %v1144, %v1190
  %1192 = vmatmul.f32.gmra.mxu0 %v1153
  %v1193 = vpop.f32.mrf.mxu0
  %v1194 = vadd.f32 %v1144, %v1193
  %1195 = vmatmul.f32.gmra.mxu0 %v1156
  %v1196 = vpop.f32.mrf.mxu0
  %v1197 = vadd.f32 %v1144, %v1196
  %1198 = vmatmul.f32.gmra.mxu0 %v1159
  %v1199 = vpop.f32.mrf.mxu0
  %v1200 = vadd.f32 %v1144, %v1199
  %1201 = vmatmul.f32.gmra.mxu0 %v1162
  %v1202 = vpop.f32.mrf.mxu0
  %v1203 = vadd.f32 %v1144, %v1202
  %1204 = vmatmul.f32.gmra.mxu0 %v1165
  %v1205 = vpop.f32.mrf.mxu0
  %v1206 = vadd.f32 %v1144, %v1205
  %1207 = vmatmul.f32.gmra.mxu0 %v1168
  %v1208 = vpop.f32.mrf.mxu0
  %v1209 = vadd.f32 %v1144, %v1208
  %1210 = vdwg.mxu0
  %1211 = vst [vmem:[%s10] sm:$0xff] %v1188
  %1212 = vst [vmem:[%s10 + $0x8] sm:$0xff] %v1191
  %1213 = vst [vmem:[%s10 + $0x10] sm:$0xff] %v1194
  %1214 = vst [vmem:[%s10 + $0x18] sm:$0xff] %v1197
  %1215 = vst [vmem:[%s10 + $0x20] sm:$0xff] %v1200
  %1216 = vst [vmem:[%s10 + $0x28] sm:$0xff] %v1203
  %1217 = vst [vmem:[%s10 + $0x30] sm:$0xff] %v1206
  %1218 = vst [vmem:[%s10 + $0x38] sm:$0xff] %v1209
  // Predicated region
  $region42: #{qnet_forward.1} parent=0 // pred_check
    _
  $region43: #{qnet_forward.1} parent=0 // pred_check_branch
    %1220 = sbr.rel (0) target = $region45
  $region44: #{qnet_forward.1} parent=0 // pred_region
    _
  $region45: #{qnet_forward.1} parent=0 // pred_fallthru
    _
  // Predicated region
  $region46: #{qnet_forward.1} parent=0 // pred_check
    _
  $region47: #{qnet_forward.1} parent=0 // pred_check_branch
    %1222 = sbr.rel (0) target = $region49
  $region48: #{qnet_forward.1} parent=0 // pred_region
    _
  $region49: #{qnet_forward.1} parent=0 // pred_fallthru
    _
  // Predicated region
  $region50: #{qnet_forward.1} parent=0 // pred_check
    _
  $region51: #{qnet_forward.1} parent=0 // pred_check_branch
    %1224 = sbr.rel (0) target = $region53
  $region52: #{qnet_forward.1} parent=0 // pred_region
    _
  $region53: #{qnet_forward.1} parent=0 // pred_fallthru
    _
  // Predicated region
  $region54: #{qnet_forward.1} parent=0 // pred_check
    _
  $region55: #{qnet_forward.1} parent=0 // pred_check_branch
    %1226 = sbr.rel (0) target = $region57
  $region56: #{qnet_forward.1} parent=0 // pred_region
    _
  $region57: #{qnet_forward.1} parent=0 // pred_fallthru
    _
  // Predicated region
  $region58: #{qnet_forward.1} parent=0 // pred_check
    _
  $region59: #{qnet_forward.1} parent=0 // pred_check_branch
    %1228 = sbr.rel (0) target = $region61
  $region60: #{qnet_forward.1} parent=0 // pred_region
    _
  $region61: #{qnet_forward.1} parent=0 // pred_fallthru
    _
  // Predicated region
  $region62: #{qnet_forward.1} parent=0 // pred_check
    _
  $region63: #{qnet_forward.1} parent=0 // pred_check_branch
    %1230 = sbr.rel (0) target = $region65
  $region64: #{qnet_forward.1} parent=0 // pred_region
    _
  $region65: #{qnet_forward.1} parent=0 // pred_fallthru
    _

</llo_original>
